<compile_context>
chip_gen: v7x
topology: tpu7x:2x2x1
jax: 0.10.0
libtpu: 0.0.40
codegen_flags: <defaults>
</compile_context>

<pallas_src>
import jax
import jax.numpy as jnp
from jax import lax
from jax.experimental import pallas as pl
from jax.experimental.pallas import tpu as pltpu

CIN, H, W = 4, 16, 16          # input (C,H,W)
C1, C2 = 8, 8                  # conv channels
HID, NCLS = 32, 10             # MLP
HO, WO = H // 2, W // 2        # pooled spatial size (8x8)
PIX = H * W                    # 256 lanes per image (multiple of 128)
NFEAT = C2 * PIX               # fc1 contraction length (anchor-scattered weight)
BT_MAX = 32                    # images per grid step (tunable; VMEM stays ~5 MiB)


# ------------------------------- fused kernel ------------------------------- #

def _fused_cnn_kernel(x_ref, w1_ref, b1_ref, w2_ref, b2_ref,
                      w1fc_ref, b1fc_ref, w2fc_ref, b2fc_ref, o_ref):
    BT = x_ref.shape[0]
    N = BT * PIX

    # Assemble the batch tile: X (CIN, BT*256), lane l = b*256 + h*16 + w.
    # Per-image (CIN, 256) tiles are concatenated along lanes at 256-lane-aligned
    # offsets (pure vreg placement, no relayout).
    x = jnp.concatenate([x_ref[b] for b in range(BT)], axis=1)        # (CIN, N) f32

    # Per-position coordinates (one 2-D iota, VPU only; image stride 256 is a
    # multiple of 16 so the bit tricks are exact).
    lane = lax.broadcasted_iota(jnp.int32, (1, N), 1)
    wpos = lane & (W - 1)                       # column within image
    hpos = (lane >> 4) & (H - 1)                # row within image

    def tap_mask(dh, dw):
        """1.0 where source pixel (h+dh, w+dw) lies inside the image, else 0.0.
        Implements the conv zero padding and kills pltpu.roll wrap-around into
        the neighbouring image's lanes."""
        conds = []
        if dh == -1:
            conds.append(hpos >= 1)
        elif dh == 1:
            conds.append(hpos <= H - 2)
        if dw == -1:
            conds.append(wpos >= 1)
        elif dw == 1:
            conds.append(wpos <= W - 2)
        if not conds:
            return None
        m = conds[0]
        for extra in conds[1:]:
            m = jnp.logical_and(m, extra)
        return m.astype(jnp.float32)            # (1, N)

    def shifted(v, off):
        # out[:, l] = v[:, (l + off) mod N]   (np.roll semantics => shift = -off)
        return v if off == 0 else pltpu.roll(v, shift=(-off) % N, axis=1)

    def im2col(v):
        """(Cin, N) -> (9*Cin, N): 3x3 taps via XLU lane rolls + boundary masks."""
        rows = []
        for kh in range(3):
            for kw in range(3):
                dh, dw = kh - 1, kw - 1
                tap = shifted(v, dh * W + dw)
                m = tap_mask(dh, dw)
                if m is not None:
                    tap = tap * m
                rows.append(tap)
        return jnp.concatenate(rows, axis=0)

    # ---- conv1 (3x3, pad=1) + ReLU: one MXU dot, K = 9*CIN = 36, N = BT*256.
    im1 = im2col(x).astype(jnp.bfloat16)                              # (36, N)
    a1 = jnp.dot(w1_ref[...], im1, preferred_element_type=jnp.float32)
    h1 = jnp.maximum(a1 + b1_ref[...], 0.0)                           # (C1, N) f32

    # ---- conv2 (3x3, pad=1) + ReLU: one MXU dot, K = 9*C1 = 72.
    im2 = im2col(h1).astype(jnp.bfloat16)                             # (72, N)
    a2 = jnp.dot(w2_ref[...], im2, preferred_element_type=jnp.float32)
    h2 = jnp.maximum(a2 + b2_ref[...], 0.0)                           # (C2, N) f32

    # ---- fused 2x2 stride-2 max-pool. The pooled value lives at anchor lanes
    # (even h, even w); other lanes hold finite garbage that the fc1 weight
    # never reads (its rows there are exactly zero).
    pooled = jnp.maximum(jnp.maximum(h2, shifted(h2, 1)),
                         jnp.maximum(shifted(h2, W), shifted(h2, W + 1)))

    # ---- relayout for the MLP: batch moves from lanes to rows.
    # feats[b, c*256 + q] = pooled[c, b*256 + q]; built from aligned 256-lane
    # slices + concats only (no general reshape/transpose needed).
    feats = jnp.concatenate(
        [jnp.concatenate([pooled[c:c + 1, b * PIX:(b + 1) * PIX] for c in range(C2)],
                         axis=1)
         for b in range(BT)], axis=0).astype(jnp.bfloat16)            # (BT, 2048)

    # ---- fc1 (+ReLU) and fc2 (single dots; NCHW flatten + anchor scatter are
    # folded into w1fc, which is stored lane-dense (HID, 2048) in bf16).
    y1 = lax.dot_general(feats, w1fc_ref[...], (((1,), (1,)), ((), ())),
                         preferred_element_type=jnp.float32) + b1fc_ref[...]
    y1 = jnp.maximum(y1, 0.0).astype(jnp.bfloat16)                    # (BT, HID)
    y2 = lax.dot_general(y1, w2fc_ref[...], (((1,), (1,)), ((), ())),
                         preferred_element_type=jnp.float32) + b2fc_ref[...]
    o_ref[...] = y2.astype(o_ref.dtype)                               # (BT, NCLS)


# ------------------------------- parameters --------------------------------- #

def init_params(key):
    """Synthetic parameters in PyTorch layouts (Conv2d: (Cout,Cin,KH,KW), Linear: (out,in))."""
    ks = jax.random.split(key, 8)
    s = 0.1
    return {
        "conv1_w": s * jax.random.normal(ks[0], (C1, CIN, 3, 3), jnp.float32),
        "conv1_b": s * jax.random.normal(ks[1], (C1,), jnp.float32),
        "conv2_w": s * jax.random.normal(ks[2], (C2, C1, 3, 3), jnp.float32),
        "conv2_b": s * jax.random.normal(ks[3], (C2,), jnp.float32),
        "fc1_w":   s * jax.random.normal(ks[4], (HID, C2 * HO * WO), jnp.float32),
        "fc1_b":   s * jax.random.normal(ks[5], (HID,), jnp.float32),
        "fc2_w":   s * jax.random.normal(ks[6], (NCLS, HID), jnp.float32),
        "fc2_b":   s * jax.random.normal(ks[7], (NCLS,), jnp.float32),
    }


def prepare_params(p):
    """One-time conversion of PyTorch-layout params into the kernel layouts (bf16 dots)."""
    # conv weights: (Cout,Cin,KH,KW) -> (Cout, 9*Cin), column = (kh*3+kw)*Cin + ci
    w1 = jnp.transpose(p["conv1_w"], (0, 2, 3, 1)).reshape(C1, 9 * CIN).astype(jnp.bfloat16)
    w2 = jnp.transpose(p["conv2_w"], (0, 2, 3, 1)).reshape(C2, 9 * C1).astype(jnp.bfloat16)
    b1 = p["conv1_b"].reshape(C1, 1).astype(jnp.float32)
    b2 = p["conv2_b"].reshape(C2, 1).astype(jnp.float32)

    # fc1: fold the PyTorch NCHW flatten (k = c*64 + ho*8 + wo) and the pooled
    # anchor positions (q = 32*ho + 2*wo) into a dense (HID, C2*256) weight
    # (rows at non-anchor positions are zero, so garbage lanes contribute 0).
    cc, hh, ww = jnp.meshgrid(jnp.arange(C2), jnp.arange(HO), jnp.arange(WO), indexing="ij")
    src = (cc * (HO * WO) + hh * WO + ww).reshape(-1)
    dst = (cc * PIX + hh * (2 * W) + ww * 2).reshape(-1)
    w1fc = jnp.zeros((HID, NFEAT), jnp.float32).at[:, dst].set(p["fc1_w"][:, src])
    w1fc = w1fc.astype(jnp.bfloat16)
    b1fc = p["fc1_b"].reshape(1, HID).astype(jnp.float32)
    w2fc = p["fc2_w"].astype(jnp.bfloat16)                      # (NCLS, HID)
    b2fc = p["fc2_b"].reshape(1, NCLS).astype(jnp.float32)
    return dict(w1=w1, b1=b1, w2=w2, b2=b2,
                w1fc=w1fc, b1fc=b1fc, w2fc=w2fc, b2fc=b2fc)


# ------------------------------- forward pass -------------------------------- #

@jax.jit
def cnn_forward(x_nchw, kp):
    B = x_nchw.shape[0]
    BT = min(BT_MAX, B)
    Bp = ((B + BT - 1) // BT) * BT
    xr = x_nchw.reshape(B, CIN, PIX).astype(jnp.float32)   # free reshape, no pad glue
    if Bp != B:
        xr = jnp.pad(xr, ((0, Bp - B), (0, 0), (0, 0)))

    const2 = lambda i: (0, 0)
    out = pl.pallas_call(
        _fused_cnn_kernel,
        grid=(Bp // BT,),
        in_specs=[
            pl.BlockSpec((BT, CIN, PIX), lambda i: (i, 0, 0)),   # x tile (BT images)
            pl.BlockSpec((C1, 9 * CIN), const2),                 # conv1 weight (bf16)
            pl.BlockSpec((C1, 1), const2),                       # conv1 bias
            pl.BlockSpec((C2, 9 * C1), const2),                  # conv2 weight (bf16)
            pl.BlockSpec((C2, 1), const2),                       # conv2 bias
            pl.BlockSpec((HID, NFEAT), const2),                  # fc1 weight (scattered, bf16)
            pl.BlockSpec((1, HID), const2),                      # fc1 bias
            pl.BlockSpec((NCLS, HID), const2),                   # fc2 weight (bf16)
            pl.BlockSpec((1, NCLS), const2),                     # fc2 bias
        ],
        out_specs=pl.BlockSpec((BT, NCLS), lambda i: (i, 0)),
        out_shape=jax.ShapeDtypeStruct((Bp, NCLS), jnp.float32),
        compiler_params=pltpu.CompilerParams(
            dimension_semantics=("parallel",),                   # shard batch tiles over TCs
            vmem_limit_bytes=32 * 1024 * 1024,
        ),
    )(xr, kp["w1"], kp["b1"], kp["w2"], kp["b2"],
      kp["w1fc"], kp["b1fc"], kp["w2fc"], kp["b2fc"])
    return out[:B]


# ------------------------------- reference ----------------------------------- #

def cnn_reference(x, p):
    y = lax.conv_general_dilated(x, p["conv1_w"], (1, 1), ((1, 1), (1, 1)),
                                 dimension_numbers=("NCHW", "OIHW", "NCHW"))
    y = jax.nn.relu(y + p["conv1_b"][None, :, None, None])
    y = lax.conv_general_dilated(y, p["conv2_w"], (1, 1), ((1, 1), (1, 1)),
                                 dimension_numbers=("NCHW", "OIHW", "NCHW"))
    y = jax.nn.relu(y + p["conv2_b"][None, :, None, None])
    y = lax.reduce_window(y, -jnp.inf, lax.max, (1, 1, 2, 2), (1, 1, 2, 2), "VALID")
    f = y.reshape(y.shape[0], -1)
    h = jax.nn.relu(f @ p["fc1_w"].T + p["fc1_b"])
    return h @ p["fc2_w"].T + p["fc2_b"]


if __name__ == "__main__":
    key = jax.random.PRNGKey(0)
    k_x, k_p = jax.random.split(key)
    x = jax.random.normal(k_x, (2, CIN, H, W), jnp.float32)      # NCHW, like PyTorch
    torch_params = init_params(k_p)
    kernel_params = prepare_params(torch_params)

    out = cnn_forward(x, kernel_params)
    out = jax.block_until_ready(out)
    assert out.shape == (2, NCLS)
    assert bool(jnp.all(jnp.isfinite(out)))

    ref = cnn_reference(x, torch_params)
    err = float(jnp.max(jnp.abs(out - ref)))
    assert err < 6e-2, f"mismatch vs reference: {err}"
    print("KERNEL_OK")
</pallas_src>

<mosaic_0001>
module attributes {stable_mosaic.version = 11 : i64} {
  func.func @_fused_cnn_kernel(%arg0: i32, %arg1: memref<2x4x256xf32, #tpu.memory_space<vmem>>, %arg2: memref<8x36xbf16, #tpu.memory_space<vmem>>, %arg3: memref<8x1xf32, #tpu.memory_space<vmem>>, %arg4: memref<8x72xbf16, #tpu.memory_space<vmem>>, %arg5: memref<8x1xf32, #tpu.memory_space<vmem>>, %arg6: memref<32x2048xbf16, #tpu.memory_space<vmem>>, %arg7: memref<1x32xf32, #tpu.memory_space<vmem>>, %arg8: memref<10x32xbf16, #tpu.memory_space<vmem>>, %arg9: memref<1x10xf32, #tpu.memory_space<vmem>>, %arg10: memref<2x10xf32, #tpu.memory_space<vmem>>) attributes {dimension_semantics = [#tpu.dimension_semantics<parallel>], iteration_bounds = array<i64: 1>, scalar_prefetch = 0 : i64, scratch_operands = 0 : i64, tpu.core_type = #tpu.core_type<tc>, window_params = [{transform_indices = @transform_0, window_bounds = array<i64: 2, 4, 256>}, {pipeline_mode = #tpu.pipeline_mode<synchronous>, transform_indices = @transform_1, window_bounds = array<i64: 8, 36>}, {pipeline_mode = #tpu.pipeline_mode<synchronous>, transform_indices = @transform_2, window_bounds = array<i64: 8, 1>}, {pipeline_mode = #tpu.pipeline_mode<synchronous>, transform_indices = @transform_3, window_bounds = array<i64: 8, 72>}, {pipeline_mode = #tpu.pipeline_mode<synchronous>, transform_indices = @transform_4, window_bounds = array<i64: 8, 1>}, {pipeline_mode = #tpu.pipeline_mode<synchronous>, transform_indices = @transform_5, window_bounds = array<i64: 32, 2048>}, {pipeline_mode = #tpu.pipeline_mode<synchronous>, transform_indices = @transform_6, window_bounds = array<i64: 1, 32>}, {pipeline_mode = #tpu.pipeline_mode<synchronous>, transform_indices = @transform_7, window_bounds = array<i64: 10, 32>}, {pipeline_mode = #tpu.pipeline_mode<synchronous>, transform_indices = @transform_8, window_bounds = array<i64: 1, 10>}, {transform_indices = @transform_9, window_bounds = array<i64: 2, 10>}]} {
    %c0 = arith.constant 0 : index
    %c0_0 = arith.constant 0 : index
    %c0_1 = arith.constant 0 : index
    %0 = vector.load %arg1[%c0, %c0_0, %c0_1] : memref<2x4x256xf32, #tpu.memory_space<vmem>>, vector<1x4x256xf32>
    %1 = vector.shape_cast %0 : vector<1x4x256xf32> to vector<4x256xf32>
    %c1 = arith.constant 1 : index
    %c0_2 = arith.constant 0 : index
    %c0_3 = arith.constant 0 : index
    %2 = vector.load %arg1[%c1, %c0_2, %c0_3] : memref<2x4x256xf32, #tpu.memory_space<vmem>>, vector<1x4x256xf32>
    %3 = vector.shape_cast %2 : vector<1x4x256xf32> to vector<4x256xf32>
    %4 = tpu.concatenate %1, %3 in 1 : vector<4x256xf32>, vector<4x256xf32> -> vector<4x512xf32>
    %5 = tpu.iota {dimensions = array<i32: 1>} : vector<1x512xi32>
    %c15_i32 = arith.constant 15 : i32
    %6 = vector.broadcast %c15_i32 : i32 to vector<1x512xi32>
    %7 = arith.andi %5, %6 : vector<1x512xi32>
    %c4_i32 = arith.constant 4 : i32
    %8 = vector.broadcast %c4_i32 : i32 to vector<1x512xi32>
    %9 = arith.shrsi %5, %8 : vector<1x512xi32>
    %c15_i32_4 = arith.constant 15 : i32
    %10 = vector.broadcast %c15_i32_4 : i32 to vector<1x512xi32>
    %11 = arith.andi %9, %10 : vector<1x512xi32>
    %c17_i32 = arith.constant 17 : i32
    %12 = tpu.dynamic_rotate %4 by %c17_i32 dim 1 : vector<4x512xf32>, i32 -> vector<4x512xf32>
    %c1_i32 = arith.constant 1 : i32
    %13 = vector.broadcast %c1_i32 : i32 to vector<1x512xi32>
    %14 = arith.cmpi sge, %11, %13 : vector<1x512xi32>
    %c1_i32_5 = arith.constant 1 : i32
    %15 = vector.broadcast %c1_i32_5 : i32 to vector<1x512xi32>
    %16 = arith.cmpi sge, %7, %15 : vector<1x512xi32>
    %17 = arith.andi %14, %16 : vector<1x512xi1>
    %18 = arith.extui %17 : vector<1x512xi1> to vector<1x512xi32>
    %19 = arith.sitofp %18 : vector<1x512xi32> to vector<1x512xf32>
    %20 = vector.broadcast %19 : vector<1x512xf32> to vector<4x512xf32>
    %21 = arith.mulf %12, %20 : vector<4x512xf32>
    %c16_i32 = arith.constant 16 : i32
    %22 = tpu.dynamic_rotate %4 by %c16_i32 dim 1 : vector<4x512xf32>, i32 -> vector<4x512xf32>
    %c1_i32_6 = arith.constant 1 : i32
    %23 = vector.broadcast %c1_i32_6 : i32 to vector<1x512xi32>
    %24 = arith.cmpi sge, %11, %23 : vector<1x512xi32>
    %25 = arith.extui %24 : vector<1x512xi1> to vector<1x512xi32>
    %26 = arith.sitofp %25 : vector<1x512xi32> to vector<1x512xf32>
    %27 = vector.broadcast %26 : vector<1x512xf32> to vector<4x512xf32>
    %28 = arith.mulf %22, %27 : vector<4x512xf32>
    %c15_i32_7 = arith.constant 15 : i32
    %29 = tpu.dynamic_rotate %4 by %c15_i32_7 dim 1 : vector<4x512xf32>, i32 -> vector<4x512xf32>
    %c1_i32_8 = arith.constant 1 : i32
    %30 = vector.broadcast %c1_i32_8 : i32 to vector<1x512xi32>
    %31 = arith.cmpi sge, %11, %30 : vector<1x512xi32>
    %c14_i32 = arith.constant 14 : i32
    %32 = vector.broadcast %c14_i32 : i32 to vector<1x512xi32>
    %33 = arith.cmpi sle, %7, %32 : vector<1x512xi32>
    %34 = arith.andi %31, %33 : vector<1x512xi1>
    %35 = arith.extui %34 : vector<1x512xi1> to vector<1x512xi32>
    %36 = arith.sitofp %35 : vector<1x512xi32> to vector<1x512xf32>
    %37 = vector.broadcast %36 : vector<1x512xf32> to vector<4x512xf32>
    %38 = arith.mulf %29, %37 : vector<4x512xf32>
    %c1_i32_9 = arith.constant 1 : i32
    %39 = tpu.dynamic_rotate %4 by %c1_i32_9 dim 1 : vector<4x512xf32>, i32 -> vector<4x512xf32>
    %c1_i32_10 = arith.constant 1 : i32
    %40 = vector.broadcast %c1_i32_10 : i32 to vector<1x512xi32>
    %41 = arith.cmpi sge, %7, %40 : vector<1x512xi32>
    %42 = arith.extui %41 : vector<1x512xi1> to vector<1x512xi32>
    %43 = arith.sitofp %42 : vector<1x512xi32> to vector<1x512xf32>
    %44 = vector.broadcast %43 : vector<1x512xf32> to vector<4x512xf32>
    %45 = arith.mulf %39, %44 : vector<4x512xf32>
    %c511_i32 = arith.constant 511 : i32
    %46 = tpu.dynamic_rotate %4 by %c511_i32 dim 1 : vector<4x512xf32>, i32 -> vector<4x512xf32>
    %c14_i32_11 = arith.constant 14 : i32
    %47 = vector.broadcast %c14_i32_11 : i32 to vector<1x512xi32>
    %48 = arith.cmpi sle, %7, %47 : vector<1x512xi32>
    %49 = arith.extui %48 : vector<1x512xi1> to vector<1x512xi32>
    %50 = arith.sitofp %49 : vector<1x512xi32> to vector<1x512xf32>
    %51 = vector.broadcast %50 : vector<1x512xf32> to vector<4x512xf32>
    %52 = arith.mulf %46, %51 : vector<4x512xf32>
    %c497_i32 = arith.constant 497 : i32
    %53 = tpu.dynamic_rotate %4 by %c497_i32 dim 1 : vector<4x512xf32>, i32 -> vector<4x512xf32>
    %c14_i32_12 = arith.constant 14 : i32
    %54 = vector.broadcast %c14_i32_12 : i32 to vector<1x512xi32>
    %55 = arith.cmpi sle, %11, %54 : vector<1x512xi32>
    %c1_i32_13 = arith.constant 1 : i32
    %56 = vector.broadcast %c1_i32_13 : i32 to vector<1x512xi32>
    %57 = arith.cmpi sge, %7, %56 : vector<1x512xi32>
    %58 = arith.andi %55, %57 : vector<1x512xi1>
    %59 = arith.extui %58 : vector<1x512xi1> to vector<1x512xi32>
    %60 = arith.sitofp %59 : vector<1x512xi32> to vector<1x512xf32>
    %61 = vector.broadcast %60 : vector<1x512xf32> to vector<4x512xf32>
    %62 = arith.mulf %53, %61 : vector<4x512xf32>
    %c496_i32 = arith.constant 496 : i32
    %63 = tpu.dynamic_rotate %4 by %c496_i32 dim 1 : vector<4x512xf32>, i32 -> vector<4x512xf32>
    %c14_i32_14 = arith.constant 14 : i32
    %64 = vector.broadcast %c14_i32_14 : i32 to vector<1x512xi32>
    %65 = arith.cmpi sle, %11, %64 : vector<1x512xi32>
    %66 = arith.extui %65 : vector<1x512xi1> to vector<1x512xi32>
    %67 = arith.sitofp %66 : vector<1x512xi32> to vector<1x512xf32>
    %68 = vector.broadcast %67 : vector<1x512xf32> to vector<4x512xf32>
    %69 = arith.mulf %63, %68 : vector<4x512xf32>
    %c495_i32 = arith.constant 495 : i32
    %70 = tpu.dynamic_rotate %4 by %c495_i32 dim 1 : vector<4x512xf32>, i32 -> vector<4x512xf32>
    %c14_i32_15 = arith.constant 14 : i32
    %71 = vector.broadcast %c14_i32_15 : i32 to vector<1x512xi32>
    %72 = arith.cmpi sle, %11, %71 : vector<1x512xi32>
    %c14_i32_16 = arith.constant 14 : i32
    %73 = vector.broadcast %c14_i32_16 : i32 to vector<1x512xi32>
    %74 = arith.cmpi sle, %7, %73 : vector<1x512xi32>
    %75 = arith.andi %72, %74 : vector<1x512xi1>
    %76 = arith.extui %75 : vector<1x512xi1> to vector<1x512xi32>
    %77 = arith.sitofp %76 : vector<1x512xi32> to vector<1x512xf32>
    %78 = vector.broadcast %77 : vector<1x512xf32> to vector<4x512xf32>
    %79 = arith.mulf %70, %78 : vector<4x512xf32>
    %80 = tpu.concatenate %21, %28, %38, %45, %4, %52, %62, %69, %79 in 0 : vector<4x512xf32>, vector<4x512xf32>, vector<4x512xf32>, vector<4x512xf32>, vector<4x512xf32>, vector<4x512xf32>, vector<4x512xf32>, vector<4x512xf32>, vector<4x512xf32> -> vector<36x512xf32>
    %81 = arith.truncf %80 : vector<36x512xf32> to vector<36x512xbf16>
    %c0_17 = arith.constant 0 : index
    %c0_18 = arith.constant 0 : index
    %82 = vector.load %arg2[%c0_17, %c0_18] : memref<8x36xbf16, #tpu.memory_space<vmem>>, vector<8x36xbf16>
    %cst = arith.constant dense<0.000000e+00> : vector<8x512xf32>
    %83 = tpu.matmul %82, %81, %cst {dimension_numbers = #tpu.dot_dimension_numbers<[1], [0], [0], [1], [0, 0, 1, 1], [], []>} : vector<8x36xbf16>, vector<36x512xbf16>, vector<8x512xf32> -> vector<8x512xf32>
    %c0_19 = arith.constant 0 : index
    %c0_20 = arith.constant 0 : index
    %84 = vector.load %arg3[%c0_19, %c0_20] : memref<8x1xf32, #tpu.memory_space<vmem>>, vector<8x1xf32>
    %85 = vector.broadcast %84 : vector<8x1xf32> to vector<8x512xf32>
    %86 = arith.addf %83, %85 : vector<8x512xf32>
    %cst_21 = arith.constant 0.000000e+00 : f32
    %87 = vector.broadcast %cst_21 : f32 to vector<8x512xf32>
    %88 = arith.maximumf %86, %87 : vector<8x512xf32>
    %c17_i32_22 = arith.constant 17 : i32
    %89 = tpu.dynamic_rotate %88 by %c17_i32_22 dim 1 : vector<8x512xf32>, i32 -> vector<8x512xf32>
    %c1_i32_23 = arith.constant 1 : i32
    %90 = vector.broadcast %c1_i32_23 : i32 to vector<1x512xi32>
    %91 = arith.cmpi sge, %11, %90 : vector<1x512xi32>
    %c1_i32_24 = arith.constant 1 : i32
    %92 = vector.broadcast %c1_i32_24 : i32 to vector<1x512xi32>
    %93 = arith.cmpi sge, %7, %92 : vector<1x512xi32>
    %94 = arith.andi %91, %93 : vector<1x512xi1>
    %95 = arith.extui %94 : vector<1x512xi1> to vector<1x512xi32>
    %96 = arith.sitofp %95 : vector<1x512xi32> to vector<1x512xf32>
    %97 = vector.broadcast %96 : vector<1x512xf32> to vector<8x512xf32>
    %98 = arith.mulf %89, %97 : vector<8x512xf32>
    %c16_i32_25 = arith.constant 16 : i32
    %99 = tpu.dynamic_rotate %88 by %c16_i32_25 dim 1 : vector<8x512xf32>, i32 -> vector<8x512xf32>
    %c1_i32_26 = arith.constant 1 : i32
    %100 = vector.broadcast %c1_i32_26 : i32 to vector<1x512xi32>
    %101 = arith.cmpi sge, %11, %100 : vector<1x512xi32>
    %102 = arith.extui %101 : vector<1x512xi1> to vector<1x512xi32>
    %103 = arith.sitofp %102 : vector<1x512xi32> to vector<1x512xf32>
    %104 = vector.broadcast %103 : vector<1x512xf32> to vector<8x512xf32>
    %105 = arith.mulf %99, %104 : vector<8x512xf32>
    %c15_i32_27 = arith.constant 15 : i32
    %106 = tpu.dynamic_rotate %88 by %c15_i32_27 dim 1 : vector<8x512xf32>, i32 -> vector<8x512xf32>
    %c1_i32_28 = arith.constant 1 : i32
    %107 = vector.broadcast %c1_i32_28 : i32 to vector<1x512xi32>
    %108 = arith.cmpi sge, %11, %107 : vector<1x512xi32>
    %c14_i32_29 = arith.constant 14 : i32
    %109 = vector.broadcast %c14_i32_29 : i32 to vector<1x512xi32>
    %110 = arith.cmpi sle, %7, %109 : vector<1x512xi32>
    %111 = arith.andi %108, %110 : vector<1x512xi1>
    %112 = arith.extui %111 : vector<1x512xi1> to vector<1x512xi32>
    %113 = arith.sitofp %112 : vector<1x512xi32> to vector<1x512xf32>
    %114 = vector.broadcast %113 : vector<1x512xf32> to vector<8x512xf32>
    %115 = arith.mulf %106, %114 : vector<8x512xf32>
    %c1_i32_30 = arith.constant 1 : i32
    %116 = tpu.dynamic_rotate %88 by %c1_i32_30 dim 1 : vector<8x512xf32>, i32 -> vector<8x512xf32>
    %c1_i32_31 = arith.constant 1 : i32
    %117 = vector.broadcast %c1_i32_31 : i32 to vector<1x512xi32>
    %118 = arith.cmpi sge, %7, %117 : vector<1x512xi32>
    %119 = arith.extui %118 : vector<1x512xi1> to vector<1x512xi32>
    %120 = arith.sitofp %119 : vector<1x512xi32> to vector<1x512xf32>
    %121 = vector.broadcast %120 : vector<1x512xf32> to vector<8x512xf32>
    %122 = arith.mulf %116, %121 : vector<8x512xf32>
    %c511_i32_32 = arith.constant 511 : i32
    %123 = tpu.dynamic_rotate %88 by %c511_i32_32 dim 1 : vector<8x512xf32>, i32 -> vector<8x512xf32>
    %c14_i32_33 = arith.constant 14 : i32
    %124 = vector.broadcast %c14_i32_33 : i32 to vector<1x512xi32>
    %125 = arith.cmpi sle, %7, %124 : vector<1x512xi32>
    %126 = arith.extui %125 : vector<1x512xi1> to vector<1x512xi32>
    %127 = arith.sitofp %126 : vector<1x512xi32> to vector<1x512xf32>
    %128 = vector.broadcast %127 : vector<1x512xf32> to vector<8x512xf32>
    %129 = arith.mulf %123, %128 : vector<8x512xf32>
    %c497_i32_34 = arith.constant 497 : i32
    %130 = tpu.dynamic_rotate %88 by %c497_i32_34 dim 1 : vector<8x512xf32>, i32 -> vector<8x512xf32>
    %c14_i32_35 = arith.constant 14 : i32
    %131 = vector.broadcast %c14_i32_35 : i32 to vector<1x512xi32>
    %132 = arith.cmpi sle, %11, %131 : vector<1x512xi32>
    %c1_i32_36 = arith.constant 1 : i32
    %133 = vector.broadcast %c1_i32_36 : i32 to vector<1x512xi32>
    %134 = arith.cmpi sge, %7, %133 : vector<1x512xi32>
    %135 = arith.andi %132, %134 : vector<1x512xi1>
    %136 = arith.extui %135 : vector<1x512xi1> to vector<1x512xi32>
    %137 = arith.sitofp %136 : vector<1x512xi32> to vector<1x512xf32>
    %138 = vector.broadcast %137 : vector<1x512xf32> to vector<8x512xf32>
    %139 = arith.mulf %130, %138 : vector<8x512xf32>
    %c496_i32_37 = arith.constant 496 : i32
    %140 = tpu.dynamic_rotate %88 by %c496_i32_37 dim 1 : vector<8x512xf32>, i32 -> vector<8x512xf32>
    %c14_i32_38 = arith.constant 14 : i32
    %141 = vector.broadcast %c14_i32_38 : i32 to vector<1x512xi32>
    %142 = arith.cmpi sle, %11, %141 : vector<1x512xi32>
    %143 = arith.extui %142 : vector<1x512xi1> to vector<1x512xi32>
    %144 = arith.sitofp %143 : vector<1x512xi32> to vector<1x512xf32>
    %145 = vector.broadcast %144 : vector<1x512xf32> to vector<8x512xf32>
    %146 = arith.mulf %140, %145 : vector<8x512xf32>
    %c495_i32_39 = arith.constant 495 : i32
    %147 = tpu.dynamic_rotate %88 by %c495_i32_39 dim 1 : vector<8x512xf32>, i32 -> vector<8x512xf32>
    %c14_i32_40 = arith.constant 14 : i32
    %148 = vector.broadcast %c14_i32_40 : i32 to vector<1x512xi32>
    %149 = arith.cmpi sle, %11, %148 : vector<1x512xi32>
    %c14_i32_41 = arith.constant 14 : i32
    %150 = vector.broadcast %c14_i32_41 : i32 to vector<1x512xi32>
    %151 = arith.cmpi sle, %7, %150 : vector<1x512xi32>
    %152 = arith.andi %149, %151 : vector<1x512xi1>
    %153 = arith.extui %152 : vector<1x512xi1> to vector<1x512xi32>
    %154 = arith.sitofp %153 : vector<1x512xi32> to vector<1x512xf32>
    %155 = vector.broadcast %154 : vector<1x512xf32> to vector<8x512xf32>
    %156 = arith.mulf %147, %155 : vector<8x512xf32>
    %157 = tpu.concatenate %98, %105, %115, %122, %88, %129, %139, %146, %156 in 0 : vector<8x512xf32>, vector<8x512xf32>, vector<8x512xf32>, vector<8x512xf32>, vector<8x512xf32>, vector<8x512xf32>, vector<8x512xf32>, vector<8x512xf32>, vector<8x512xf32> -> vector<72x512xf32>
    %158 = arith.truncf %157 : vector<72x512xf32> to vector<72x512xbf16>
    %c0_42 = arith.constant 0 : index
    %c0_43 = arith.constant 0 : index
    %159 = vector.load %arg4[%c0_42, %c0_43] : memref<8x72xbf16, #tpu.memory_space<vmem>>, vector<8x72xbf16>
    %cst_44 = arith.constant dense<0.000000e+00> : vector<8x512xf32>
    %160 = tpu.matmul %159, %158, %cst_44 {dimension_numbers = #tpu.dot_dimension_numbers<[1], [0], [0], [1], [0, 0, 1, 1], [], []>} : vector<8x72xbf16>, vector<72x512xbf16>, vector<8x512xf32> -> vector<8x512xf32>
    %c0_45 = arith.constant 0 : index
    %c0_46 = arith.constant 0 : index
    %161 = vector.load %arg5[%c0_45, %c0_46] : memref<8x1xf32, #tpu.memory_space<vmem>>, vector<8x1xf32>
    %162 = vector.broadcast %161 : vector<8x1xf32> to vector<8x512xf32>
    %163 = arith.addf %160, %162 : vector<8x512xf32>
    %cst_47 = arith.constant 0.000000e+00 : f32
    %164 = vector.broadcast %cst_47 : f32 to vector<8x512xf32>
    %165 = arith.maximumf %163, %164 : vector<8x512xf32>
    %c511_i32_48 = arith.constant 511 : i32
    %166 = tpu.dynamic_rotate %165 by %c511_i32_48 dim 1 : vector<8x512xf32>, i32 -> vector<8x512xf32>
    %167 = arith.maximumf %165, %166 : vector<8x512xf32>
    %c496_i32_49 = arith.constant 496 : i32
    %168 = tpu.dynamic_rotate %165 by %c496_i32_49 dim 1 : vector<8x512xf32>, i32 -> vector<8x512xf32>
    %c495_i32_50 = arith.constant 495 : i32
    %169 = tpu.dynamic_rotate %165 by %c495_i32_50 dim 1 : vector<8x512xf32>, i32 -> vector<8x512xf32>
    %170 = arith.maximumf %168, %169 : vector<8x512xf32>
    %171 = arith.maximumf %167, %170 : vector<8x512xf32>
    %172 = vector.extract_strided_slice %171 {offsets = [0, 0], sizes = [1, 256], strides = [1, 1]} : vector<8x512xf32> to vector<1x256xf32>
    %173 = vector.extract_strided_slice %171 {offsets = [1, 0], sizes = [1, 256], strides = [1, 1]} : vector<8x512xf32> to vector<1x256xf32>
    %174 = vector.extract_strided_slice %171 {offsets = [2, 0], sizes = [1, 256], strides = [1, 1]} : vector<8x512xf32> to vector<1x256xf32>
    %175 = vector.extract_strided_slice %171 {offsets = [3, 0], sizes = [1, 256], strides = [1, 1]} : vector<8x512xf32> to vector<1x256xf32>
    %176 = vector.extract_strided_slice %171 {offsets = [4, 0], sizes = [1, 256], strides = [1, 1]} : vector<8x512xf32> to vector<1x256xf32>
    %177 = vector.extract_strided_slice %171 {offsets = [5, 0], sizes = [1, 256], strides = [1, 1]} : vector<8x512xf32> to vector<1x256xf32>
    %178 = vector.extract_strided_slice %171 {offsets = [6, 0], sizes = [1, 256], strides = [1, 1]} : vector<8x512xf32> to vector<1x256xf32>
    %179 = vector.extract_strided_slice %171 {offsets = [7, 0], sizes = [1, 256], strides = [1, 1]} : vector<8x512xf32> to vector<1x256xf32>
    %180 = tpu.concatenate %172, %173, %174, %175, %176, %177, %178, %179 in 1 : vector<1x256xf32>, vector<1x256xf32>, vector<1x256xf32>, vector<1x256xf32>, vector<1x256xf32>, vector<1x256xf32>, vector<1x256xf32>, vector<1x256xf32> -> vector<1x2048xf32>
    %181 = vector.extract_strided_slice %171 {offsets = [0, 256], sizes = [1, 256], strides = [1, 1]} : vector<8x512xf32> to vector<1x256xf32>
    %182 = vector.extract_strided_slice %171 {offsets = [1, 256], sizes = [1, 256], strides = [1, 1]} : vector<8x512xf32> to vector<1x256xf32>
    %183 = vector.extract_strided_slice %171 {offsets = [2, 256], sizes = [1, 256], strides = [1, 1]} : vector<8x512xf32> to vector<1x256xf32>
    %184 = vector.extract_strided_slice %171 {offsets = [3, 256], sizes = [1, 256], strides = [1, 1]} : vector<8x512xf32> to vector<1x256xf32>
    %185 = vector.extract_strided_slice %171 {offsets = [4, 256], sizes = [1, 256], strides = [1, 1]} : vector<8x512xf32> to vector<1x256xf32>
    %186 = vector.extract_strided_slice %171 {offsets = [5, 256], sizes = [1, 256], strides = [1, 1]} : vector<8x512xf32> to vector<1x256xf32>
    %187 = vector.extract_strided_slice %171 {offsets = [6, 256], sizes = [1, 256], strides = [1, 1]} : vector<8x512xf32> to vector<1x256xf32>
    %188 = vector.extract_strided_slice %171 {offsets = [7, 256], sizes = [1, 256], strides = [1, 1]} : vector<8x512xf32> to vector<1x256xf32>
    %189 = tpu.concatenate %181, %182, %183, %184, %185, %186, %187, %188 in 1 : vector<1x256xf32>, vector<1x256xf32>, vector<1x256xf32>, vector<1x256xf32>, vector<1x256xf32>, vector<1x256xf32>, vector<1x256xf32>, vector<1x256xf32> -> vector<1x2048xf32>
    %190 = tpu.concatenate %180, %189 in 0 : vector<1x2048xf32>, vector<1x2048xf32> -> vector<2x2048xf32>
    %191 = arith.truncf %190 : vector<2x2048xf32> to vector<2x2048xbf16>
    %c0_51 = arith.constant 0 : index
    %c0_52 = arith.constant 0 : index
    %192 = vector.load %arg6[%c0_51, %c0_52] : memref<32x2048xbf16, #tpu.memory_space<vmem>>, vector<32x2048xbf16>
    %cst_53 = arith.constant dense<0.000000e+00> : vector<2x32xf32>
    %193 = tpu.matmul %191, %192, %cst_53 {dimension_numbers = #tpu.dot_dimension_numbers<[1], [1], [0], [0], [0, 0, 1, 0], [], []>} : vector<2x2048xbf16>, vector<32x2048xbf16>, vector<2x32xf32> -> vector<2x32xf32>
    %c0_54 = arith.constant 0 : index
    %c0_55 = arith.constant 0 : index
    %194 = vector.load %arg7[%c0_54, %c0_55] : memref<1x32xf32, #tpu.memory_space<vmem>>, vector<1x32xf32>
    %195 = vector.broadcast %194 : vector<1x32xf32> to vector<2x32xf32>
    %196 = arith.addf %193, %195 : vector<2x32xf32>
    %cst_56 = arith.constant 0.000000e+00 : f32
    %197 = vector.broadcast %cst_56 : f32 to vector<2x32xf32>
    %198 = arith.maximumf %196, %197 : vector<2x32xf32>
    %199 = arith.truncf %198 : vector<2x32xf32> to vector<2x32xbf16>
    %c0_57 = arith.constant 0 : index
    %c0_58 = arith.constant 0 : index
    %200 = vector.load %arg8[%c0_57, %c0_58] : memref<10x32xbf16, #tpu.memory_space<vmem>>, vector<10x32xbf16>
    %cst_59 = arith.constant dense<0.000000e+00> : vector<2x10xf32>
    %201 = tpu.matmul %199, %200, %cst_59 {dimension_numbers = #tpu.dot_dimension_numbers<[1], [1], [0], [0], [0, 0, 1, 0], [], []>} : vector<2x32xbf16>, vector<10x32xbf16>, vector<2x10xf32> -> vector<2x10xf32>
    %c0_60 = arith.constant 0 : index
    %c0_61 = arith.constant 0 : index
    %202 = vector.load %arg9[%c0_60, %c0_61] : memref<1x10xf32, #tpu.memory_space<vmem>>, vector<1x10xf32>
    %203 = vector.broadcast %202 : vector<1x10xf32> to vector<2x10xf32>
    %204 = arith.addf %201, %203 : vector<2x10xf32>
    %c0_62 = arith.constant 0 : index
    %c0_63 = arith.constant 0 : index
    %205 = vector.load %arg10[%c0_62, %c0_63] : memref<2x10xf32, #tpu.memory_space<vmem>>, vector<2x10xf32>
    tpu.vector_store %arg10[%c0_62, %c0_63], %204 {strides = array<i32>} : memref<2x10xf32, #tpu.memory_space<vmem>>, vector<2x10xf32>,
    return
  }
  func.func @transform_0(%arg0: i32) -> (i32, i32, i32) {
    %c0_i32 = arith.constant 0 : i32
    %c0_i32_0 = arith.constant 0 : i32
    %c0_i32_1 = arith.constant 0 : i32
    return %arg0, %c0_i32, %c0_i32_0 : i32, i32, i32
  }
  func.func @transform_1(%arg0: i32) -> (i32, i32) {
    %c0_i32 = arith.constant 0 : i32
    %c0_i32_0 = arith.constant 0 : i32
    %c0_i32_1 = arith.constant 0 : i32
    return %c0_i32, %c0_i32_0 : i32, i32
  }
  func.func @transform_2(%arg0: i32) -> (i32, i32) {
    %c0_i32 = arith.constant 0 : i32
    %c0_i32_0 = arith.constant 0 : i32
    %c0_i32_1 = arith.constant 0 : i32
    return %c0_i32, %c0_i32_0 : i32, i32
  }
  func.func @transform_3(%arg0: i32) -> (i32, i32) {
    %c0_i32 = arith.constant 0 : i32
    %c0_i32_0 = arith.constant 0 : i32
    %c0_i32_1 = arith.constant 0 : i32
    return %c0_i32, %c0_i32_0 : i32, i32
  }
  func.func @transform_4(%arg0: i32) -> (i32, i32) {
    %c0_i32 = arith.constant 0 : i32
    %c0_i32_0 = arith.constant 0 : i32
    %c0_i32_1 = arith.constant 0 : i32
    return %c0_i32, %c0_i32_0 : i32, i32
  }
  func.func @transform_5(%arg0: i32) -> (i32, i32) {
    %c0_i32 = arith.constant 0 : i32
    %c0_i32_0 = arith.constant 0 : i32
    %c0_i32_1 = arith.constant 0 : i32
    return %c0_i32, %c0_i32_0 : i32, i32
  }
  func.func @transform_6(%arg0: i32) -> (i32, i32) {
    %c0_i32 = arith.constant 0 : i32
    %c0_i32_0 = arith.constant 0 : i32
    %c0_i32_1 = arith.constant 0 : i32
    return %c0_i32, %c0_i32_0 : i32, i32
  }
  func.func @transform_7(%arg0: i32) -> (i32, i32) {
    %c0_i32 = arith.constant 0 : i32
    %c0_i32_0 = arith.constant 0 : i32
    %c0_i32_1 = arith.constant 0 : i32
    return %c0_i32, %c0_i32_0 : i32, i32
  }
  func.func @transform_8(%arg0: i32) -> (i32, i32) {
    %c0_i32 = arith.constant 0 : i32
    %c0_i32_0 = arith.constant 0 : i32
    %c0_i32_1 = arith.constant 0 : i32
    return %c0_i32, %c0_i32_0 : i32, i32
  }
  func.func @transform_9(%arg0: i32) -> (i32, i32) {
    %c0_i32 = arith.constant 0 : i32
    %c0_i32_0 = arith.constant 0 : i32
    return %arg0, %c0_i32 : i32, i32
  }
}

</mosaic_0001>

<llo_original>
// kernel: cnn_forward.1
$region0: #{cnn_forward.1}
  #allocation0 [shape = 'u32[]', space=smem, size = 0x4, offset = 0x4, fixed_abs, tag = 'smem constant byte address 0x4 - core index']
  #allocation1 [shape = 'u32[144,128]{1,0:T(1,128)}', space=vmem, size = 0x12000, scoped, tag = 'internal scratch']
  %s0 = inlined_call_operand.vmem [shape: f32[2,4,256], index: 0, kind: input, shape index: {}]
  %s1 = inlined_call_operand.vmem [shape: bf16[8,36], index: 1, kind: input, shape index: {}]
  %s2 = inlined_call_operand.vmem [shape: f32[8,1], index: 2, kind: input, shape index: {}]
  %s3 = inlined_call_operand.vmem [shape: bf16[8,72], index: 3, kind: input, shape index: {}]
  %s4 = inlined_call_operand.vmem [shape: f32[8,1], index: 4, kind: input, shape index: {}]
  %s5 = inlined_call_operand.hbm [shape: bf16[32,2048], index: 5, kind: input, shape index: {}]
  %s6 = inlined_call_operand.vmem [shape: f32[1,32], index: 6, kind: input, shape index: {}]
  %s7 = inlined_call_operand.vmem [shape: bf16[10,32], index: 7, kind: input, shape index: {}]
  %s8 = inlined_call_operand.vmem [shape: f32[1,10], index: 8, kind: input, shape index: {}]
  %s9 = inlined_call_operand.hbm [shape: f32[2,10], index: 9, kind: output, shape index: {}]
  %s10 = sld [smem:[#allocation0]]
  $region50: #{cnn_forward.1} parent=0
    _
  %s12 = ssub.s32 1, %s10
  %s13 = scalar_select 0, %s12, %s10
  $region1: #{cnn_forward.1} parent=0
    #allocation2 [shape = 'u8[131072]{0}', space=vmem, size = 0x20000, scoped, tag = 'input window, operand 5, single buffered']
    #allocation3 [shape = 's32[1]{0}', space=sflag, size = 0x4, scoped, tag = 'scoped memory for cnn_forward.1']
    #allocation4 [shape = 's32[1]{0}', space=sflag, size = 0x4, scoped, tag = 'scoped memory for cnn_forward.1']
    #allocation5 [shape = 'u8[1024]{0}', space=vmem, size = 0x400, scoped, tag = 'output window, operand 0, single buffered']
    %14 = vsyncpa [#allocation3], 0
    %15 = vsyncpa [#allocation4], 0
    // Predicated region
    $region2: #{cnn_forward.1} parent=1 // pred_check
      _
    $region3: #{cnn_forward.1} parent=1 // pred_check_branch
      %17 = sbr.rel (0) target = $region5
    $region4: #{cnn_forward.1} parent=1 // pred_region
      _
    $region5: #{cnn_forward.1} parent=1 // pred_fallthru
      _
    // Predicated region
    $region6: #{cnn_forward.1} parent=1 // pred_check
      _
    $region7: #{cnn_forward.1} parent=1 // pred_check_branch
      %19 = sbr.rel (0) target = $region9
    $region8: #{cnn_forward.1} parent=1 // pred_region
      _
    $region9: #{cnn_forward.1} parent=1 // pred_fallthru
      _
    // Predicated region
    $region10: #{cnn_forward.1} parent=1 // pred_check
      _
    $region11: #{cnn_forward.1} parent=1 // pred_check_branch
      %21 = sbr.rel (0) target = $region13
    $region12: #{cnn_forward.1} parent=1 // pred_region
      _
    $region13: #{cnn_forward.1} parent=1 // pred_fallthru
      _
    // Predicated region
    $region14: #{cnn_forward.1} parent=1 // pred_check
      _
    $region15: #{cnn_forward.1} parent=1 // pred_check_branch
      %23 = sbr.rel (0) target = $region17
    $region16: #{cnn_forward.1} parent=1 // pred_region
      _
    $region17: #{cnn_forward.1} parent=1 // pred_fallthru
      _
    // Predicated region
    $region18: #{cnn_forward.1} parent=1 // pred_check
      _
    $region19: #{cnn_forward.1} parent=1 // pred_check_branch
      %25 = sbr.rel (0) target = $region21
    $region20: #{cnn_forward.1} parent=1 // pred_region
      _
    $region21: #{cnn_forward.1} parent=1 // pred_fallthru
      _
    // Predicated region
    $region22: #{cnn_forward.1} parent=1 // pred_check
      _
    $region23: #{cnn_forward.1} parent=1 // pred_check_branch
      %27 = sbr.rel (0) target = $region25
    $region24: #{cnn_forward.1} parent=1 // pred_region
      %s29 = ssub.s32 4096, 4096
      %30 = vsyncadd [#allocation3], %s29
      %s31 = sshll.u32 [#allocation2], 4
      %s32 = int_to_ptr.vmem [resolvable:$true] %s31
      %37 = dma.hbm_to_vmem [thread:$0]  %s5, 4096, %s32, [#allocation3], 1024, 1024, 64
    $region25: #{cnn_forward.1} parent=1 // pred_fallthru
      _
    // Predicated region
    $region26: #{cnn_forward.1} parent=1 // pred_check
      _
    $region27: #{cnn_forward.1} parent=1 // pred_check_branch
      %39 = sbr.rel (0) target = $region29
    $region28: #{cnn_forward.1} parent=1 // pred_region
      _
    $region29: #{cnn_forward.1} parent=1 // pred_fallthru
      _
    // Predicated region
    $region30: #{cnn_forward.1} parent=1 // pred_check
      _
    $region31: #{cnn_forward.1} parent=1 // pred_check_branch
      %41 = sbr.rel (0) target = $region33
    $region32: #{cnn_forward.1} parent=1 // pred_region
      _
    $region33: #{cnn_forward.1} parent=1 // pred_fallthru
      _
    // Predicated region
    $region34: #{cnn_forward.1} parent=1 // pred_check
      _
    $region35: #{cnn_forward.1} parent=1 // pred_check_branch
      %43 = sbr.rel (0) target = $region37
    $region36: #{cnn_forward.1} parent=1 // pred_region
      _
    $region37: #{cnn_forward.1} parent=1 // pred_fallthru
      _
    // Predicated region
    $region38: #{cnn_forward.1} parent=1 // pred_check
      _
    $region39: #{cnn_forward.1} parent=1 // pred_check_branch
      %45 = sbr.rel (0) target = $region41
    $region40: #{cnn_forward.1} parent=1 // pred_region
      %46 = dma.done [#allocation3], 4096
    $region41: #{cnn_forward.1} parent=1 // pred_fallthru
      _
    %v48 = vld [vmem:[%s0] sm:$0xff]
    %s49 = scalar_lea.vmem %s0, 8
    %v50 = vld [vmem:[%s49] sm:$0xff]
    %v52 = vcombine.high %v48, %v48
    %v55 = vcombine.high %v50, %v50
    %v57 = vlaneseq
    %v58 = vand.u32 %v57, 127
    %v59 = vadd.s32 %v58, 128
    %v60 = vadd.s32 %v58, 256
    %v61 = vadd.s32 %v58, 384
    %v62 = vand.u32 %v58, 15
    %v63 = vand.u32 %v59, 15
    %v64 = vand.u32 %v60, 15
    %v65 = vand.u32 %v61, 15
    %v66 = vshra.s32 %v58, 4
    %v67 = vshra.s32 %v59, 4
    %v68 = vshra.s32 %v60, 4
    %v69 = vshra.s32 %v61, 4
    %v70 = vand.u32 %v66, 15
    %v71 = vand.u32 %v67, 15
    %v72 = vand.u32 %v68, 15
    %v73 = vand.u32 %v69, 15
    %74 = vrot.lane.b32.xlu0 %v48, 17
    %v75 = vpop.permute.xlu0 %74
    %76 = vrot.lane.b32.xlu0 %v52, 17
    %v77 = vpop.permute.xlu0 %76
    %78 = vrot.lane.b32.xlu0 %v50, 17
    %v79 = vpop.permute.xlu0 %78
    %80 = vrot.lane.b32.xlu0 %v55, 17
    %v81 = vpop.permute.xlu0 %80
    %vm82 = vcmp.lt.s32.totalorder %v58, 17
    %v83 = vsel %vm82, %v79, %v81
    %v84 = vsel %vm82, %v77, %v79
    %v85 = vsel %vm82, %v75, %v77
    %v86 = vsel %vm82, %v81, %v75
    %vm87 = vcmp.ge.s32.totalorder %v70, 1
    %vm88 = vcmp.ge.s32.totalorder %v71, 1
    %vm89 = vcmp.ge.s32.totalorder %v72, 1
    %vm90 = vcmp.ge.s32.totalorder %v73, 1
    %vm91 = vcmp.ge.s32.totalorder %v62, 1
    %vm92 = vcmp.ge.s32.totalorder %v63, 1
    %vm93 = vcmp.ge.s32.totalorder %v64, 1
    %vm94 = vcmp.ge.s32.totalorder %v65, 1
    %vm95 = vmand %vm87, %vm91
    %vm96 = vmand %vm88, %vm92
    %vm97 = vmand %vm89, %vm93
    %vm98 = vmand %vm90, %vm94
    %v99 = vsel %vm95, 1, 0
    %v100 = vsel %vm96, 1, 0
    %v101 = vsel %vm97, 1, 0
    %v102 = vsel %vm98, 1, 0
    %v103 = vcvt.s32.f32 %v99
    %v104 = vcvt.s32.f32 %v100
    %v105 = vcvt.s32.f32 %v101
    %v106 = vcvt.s32.f32 %v102
    %v107 = vmul.f32 %v86, %v103
    %v108 = vmul.f32 %v85, %v104
    %v109 = vmul.f32 %v84, %v105
    %v110 = vmul.f32 %v83, %v106
    %111 = vrot.lane.b32.xlu0 %v48, 16
    %v112 = vpop.permute.xlu0 %111
    %113 = vrot.lane.b32.xlu0 %v52, 16
    %v114 = vpop.permute.xlu0 %113
    %115 = vrot.lane.b32.xlu0 %v50, 16
    %v116 = vpop.permute.xlu0 %115
    %117 = vrot.lane.b32.xlu0 %v55, 16
    %v118 = vpop.permute.xlu0 %117
    %vm119 = vcmp.lt.s32.totalorder %v58, 16
    %v120 = vsel %vm119, %v116, %v118
    %v121 = vsel %vm119, %v114, %v116
    %v122 = vsel %vm119, %v112, %v114
    %v123 = vsel %vm119, %v118, %v112
    %v124 = vsel %vm87, 1, 0
    %v125 = vsel %vm88, 1, 0
    %v126 = vsel %vm89, 1, 0
    %v127 = vsel %vm90, 1, 0
    %v128 = vcvt.s32.f32 %v124
    %v129 = vcvt.s32.f32 %v125
    %v130 = vcvt.s32.f32 %v126
    %v131 = vcvt.s32.f32 %v127
    %v132 = vmul.f32 %v123, %v128
    %v133 = vmul.f32 %v122, %v129
    %v134 = vmul.f32 %v121, %v130
    %v135 = vmul.f32 %v120, %v131
    %136 = vrot.lane.b32.xlu0 %v48, 15
    %v137 = vpop.permute.xlu0 %136
    %138 = vrot.lane.b32.xlu0 %v52, 15
    %v139 = vpop.permute.xlu0 %138
    %140 = vrot.lane.b32.xlu0 %v50, 15
    %v141 = vpop.permute.xlu0 %140
    %142 = vrot.lane.b32.xlu0 %v55, 15
    %v143 = vpop.permute.xlu0 %142
    %vm144 = vcmp.lt.s32.totalorder %v58, 15
    %v145 = vsel %vm144, %v141, %v143
    %v146 = vsel %vm144, %v139, %v141
    %v147 = vsel %vm144, %v137, %v139
    %v148 = vsel %vm144, %v143, %v137
    %vm149 = vcmp.le.s32.totalorder %v62, 14
    %vm150 = vcmp.le.s32.totalorder %v63, 14
    %vm151 = vcmp.le.s32.totalorder %v64, 14
    %vm152 = vcmp.le.s32.totalorder %v65, 14
    %vm153 = vmand %vm87, %vm149
    %vm154 = vmand %vm88, %vm150
    %vm155 = vmand %vm89, %vm151
    %vm156 = vmand %vm90, %vm152
    %v157 = vsel %vm153, 1, 0
    %v158 = vsel %vm154, 1, 0
    %v159 = vsel %vm155, 1, 0
    %v160 = vsel %vm156, 1, 0
    %v161 = vcvt.s32.f32 %v157
    %v162 = vcvt.s32.f32 %v158
    %v163 = vcvt.s32.f32 %v159
    %v164 = vcvt.s32.f32 %v160
    %v165 = vmul.f32 %v148, %v161
    %v166 = vmul.f32 %v147, %v162
    %v167 = vmul.f32 %v146, %v163
    %v168 = vmul.f32 %v145, %v164
    %169 = vrot.lane.b32.xlu0 %v48, 1
    %v170 = vpop.permute.xlu0 %169
    %171 = vrot.lane.b32.xlu0 %v52, 1
    %v172 = vpop.permute.xlu0 %171
    %173 = vrot.lane.b32.xlu0 %v50, 1
    %v174 = vpop.permute.xlu0 %173
    %175 = vrot.lane.b32.xlu0 %v55, 1
    %v176 = vpop.permute.xlu0 %175
    %vm177 = vcmp.lt.s32.totalorder %v58, 1
    %v178 = vsel %vm177, %v174, %v176
    %v179 = vsel %vm177, %v172, %v174
    %v180 = vsel %vm177, %v170, %v172
    %v181 = vsel %vm177, %v176, %v170
    %v182 = vsel %vm91, 1, 0
    %v183 = vsel %vm92, 1, 0
    %v184 = vsel %vm93, 1, 0
    %v185 = vsel %vm94, 1, 0
    %v186 = vcvt.s32.f32 %v182
    %v187 = vcvt.s32.f32 %v183
    %v188 = vcvt.s32.f32 %v184
    %v189 = vcvt.s32.f32 %v185
    %v190 = vmul.f32 %v181, %v186
    %v191 = vmul.f32 %v180, %v187
    %v192 = vmul.f32 %v179, %v188
    %v193 = vmul.f32 %v178, %v189
    %194 = vrot.lane.b32.xlu0 %v48, 127
    %v195 = vpop.permute.xlu0 %194
    %196 = vrot.lane.b32.xlu0 %v52, 127
    %v197 = vpop.permute.xlu0 %196
    %198 = vrot.lane.b32.xlu0 %v50, 127
    %v199 = vpop.permute.xlu0 %198
    %200 = vrot.lane.b32.xlu0 %v55, 127
    %v201 = vpop.permute.xlu0 %200
    %vm202 = vcmp.lt.s32.totalorder %v58, 127
    %v203 = vsel %vm202, %v199, %v201
    %v204 = vsel %vm202, %v197, %v199
    %v205 = vsel %vm202, %v195, %v197
    %v206 = vsel %vm202, %v201, %v195
    %v207 = vsel %vm149, 1, 0
    %v208 = vsel %vm150, 1, 0
    %v209 = vsel %vm151, 1, 0
    %v210 = vsel %vm152, 1, 0
    %v211 = vcvt.s32.f32 %v207
    %v212 = vcvt.s32.f32 %v208
    %v213 = vcvt.s32.f32 %v209
    %v214 = vcvt.s32.f32 %v210
    %v215 = vmul.f32 %v205, %v211
    %v216 = vmul.f32 %v204, %v212
    %v217 = vmul.f32 %v203, %v213
    %v218 = vmul.f32 %v206, %v214
    %219 = vrot.lane.b32.xlu0 %v48, 113
    %v220 = vpop.permute.xlu0 %219
    %221 = vrot.lane.b32.xlu0 %v52, 113
    %v222 = vpop.permute.xlu0 %221
    %223 = vrot.lane.b32.xlu0 %v50, 113
    %v224 = vpop.permute.xlu0 %223
    %225 = vrot.lane.b32.xlu0 %v55, 113
    %v226 = vpop.permute.xlu0 %225
    %vm227 = vcmp.lt.s32.totalorder %v58, 113
    %v228 = vsel %vm227, %v224, %v226
    %v229 = vsel %vm227, %v222, %v224
    %v230 = vsel %vm227, %v220, %v222
    %v231 = vsel %vm227, %v226, %v220
    %vm232 = vcmp.le.s32.totalorder %v70, 14
    %vm233 = vcmp.le.s32.totalorder %v71, 14
    %vm234 = vcmp.le.s32.totalorder %v72, 14
    %vm235 = vcmp.le.s32.totalorder %v73, 14
    %vm236 = vmand %vm232, %vm91
    %vm237 = vmand %vm233, %vm92
    %vm238 = vmand %vm234, %vm93
    %vm239 = vmand %vm235, %vm94
    %v240 = vsel %vm236, 1, 0
    %v241 = vsel %vm237, 1, 0
    %v242 = vsel %vm238, 1, 0
    %v243 = vsel %vm239, 1, 0
    %v244 = vcvt.s32.f32 %v240
    %v245 = vcvt.s32.f32 %v241
    %v246 = vcvt.s32.f32 %v242
    %v247 = vcvt.s32.f32 %v243
    %v248 = vmul.f32 %v230, %v244
    %v249 = vmul.f32 %v229, %v245
    %v250 = vmul.f32 %v228, %v246
    %v251 = vmul.f32 %v231, %v247
    %252 = vrot.lane.b32.xlu0 %v48, 112
    %v253 = vpop.permute.xlu0 %252
    %254 = vrot.lane.b32.xlu0 %v52, 112
    %v255 = vpop.permute.xlu0 %254
    %256 = vrot.lane.b32.xlu0 %v50, 112
    %v257 = vpop.permute.xlu0 %256
    %258 = vrot.lane.b32.xlu0 %v55, 112
    %v259 = vpop.permute.xlu0 %258
    %vm260 = vcmp.lt.s32.totalorder %v58, 112
    %v261 = vsel %vm260, %v257, %v259
    %v262 = vsel %vm260, %v255, %v257
    %v263 = vsel %vm260, %v253, %v255
    %v264 = vsel %vm260, %v259, %v253
    %v265 = vsel %vm232, 1, 0
    %v266 = vsel %vm233, 1, 0
    %v267 = vsel %vm234, 1, 0
    %v268 = vsel %vm235, 1, 0
    %v269 = vcvt.s32.f32 %v265
    %v270 = vcvt.s32.f32 %v266
    %v271 = vcvt.s32.f32 %v267
    %v272 = vcvt.s32.f32 %v268
    %v273 = vmul.f32 %v263, %v269
    %v274 = vmul.f32 %v262, %v270
    %v275 = vmul.f32 %v261, %v271
    %v276 = vmul.f32 %v264, %v272
    %277 = vrot.lane.b32.xlu0 %v48, 111
    %v278 = vpop.permute.xlu0 %277
    %279 = vrot.lane.b32.xlu0 %v52, 111
    %v280 = vpop.permute.xlu0 %279
    %281 = vrot.lane.b32.xlu0 %v50, 111
    %v282 = vpop.permute.xlu0 %281
    %283 = vrot.lane.b32.xlu0 %v55, 111
    %v284 = vpop.permute.xlu0 %283
    %vm285 = vcmp.lt.s32.totalorder %v58, 111
    %v286 = vsel %vm285, %v282, %v284
    %v287 = vsel %vm285, %v280, %v282
    %v288 = vsel %vm285, %v278, %v280
    %v289 = vsel %vm285, %v284, %v278
    %vm290 = vmand %vm232, %vm149
    %vm291 = vmand %vm233, %vm150
    %vm292 = vmand %vm234, %vm151
    %vm293 = vmand %vm235, %vm152
    %v294 = vsel %vm290, 1, 0
    %v295 = vsel %vm291, 1, 0
    %v296 = vsel %vm292, 1, 0
    %v297 = vsel %vm293, 1, 0
    %v298 = vcvt.s32.f32 %v294
    %v299 = vcvt.s32.f32 %v295
    %v300 = vcvt.s32.f32 %v296
    %v301 = vcvt.s32.f32 %v297
    %v302 = vmul.f32 %v288, %v298
    %v303 = vmul.f32 %v287, %v299
    %v304 = vmul.f32 %v286, %v300
    %v305 = vmul.f32 %v289, %v301
    %v310 = vrot.slane %v132, 4
    %v311 = vrot.slane %v133, 4
    %v312 = vrot.slane %v134, 4
    %v313 = vrot.slane %v135, 4
    %v322 = vrot.slane %v190, 4
    %v323 = vrot.slane %v191, 4
    %v324 = vrot.slane %v192, 4
    %v325 = vrot.slane %v193, 4
    %v334 = vrot.slane %v215, 4
    %v335 = vrot.slane %v216, 4
    %v336 = vrot.slane %v217, 4
    %v337 = vrot.slane %v218, 4
    %v346 = vrot.slane %v273, 4
    %v347 = vrot.slane %v274, 4
    %v348 = vrot.slane %v275, 4
    %v349 = vrot.slane %v276, 4
    %vm354 = vcmask 1043456
    %v355 = vsel %vm354, %v107, %v310
    %v356 = vsel %vm354, %v108, %v311
    %v357 = vsel %vm354, %v109, %v312
    %v358 = vsel %vm354, %v110, %v313
    %v359 = vsel %vm354, %v165, %v322
    %v360 = vsel %vm354, %v166, %v323
    %v361 = vsel %vm354, %v167, %v324
    %v362 = vsel %vm354, %v168, %v325
    %v363 = vsel %vm354, %v48, %v334
    %v364 = vsel %vm354, %v52, %v335
    %v365 = vsel %vm354, %v50, %v336
    %v366 = vsel %vm354, %v55, %v337
    %v367 = vsel %vm354, %v248, %v346
    %v368 = vsel %vm354, %v249, %v347
    %v369 = vsel %vm354, %v250, %v348
    %v370 = vsel %vm354, %v251, %v349
    %v371 = vpack.c.bf16 %v359, %v355
    %v372 = vpack.c.bf16 %v360, %v356
    %v373 = vpack.c.bf16 %v361, %v357
    %v374 = vpack.c.bf16 %v362, %v358
    %v375 = vpack.c.bf16 %v367, %v363
    %v376 = vpack.c.bf16 %v368, %v364
    %v377 = vpack.c.bf16 %v369, %v365
    %v378 = vpack.c.bf16 %v370, %v366
    %v379 = vpack.c.bf16 %v302, %v302
    %v380 = vpack.c.bf16 %v303, %v303
    %v381 = vpack.c.bf16 %v304, %v304
    %v382 = vpack.c.bf16 %v305, %v305
    %v383 = vld [vmem:[%s1] sm:$0xf]
    %v384 = vld [vmem:[%s2] sm:$0xff]
    %386 = vset.pattern.permute.xlu0 0
    %387 = vperm.xlu0 %386, %v384
    %v388 = vpop.permute.xlu0 %387
    %vm390 = vcmask 293888
    %v392 = vsel %vm390, %v383, 0
    %vm394 = vcmask 1041408
    %v396 = vsel %vm394, %v379, 0
    %v399 = vsel %vm394, %v380, 0
    %v402 = vsel %vm394, %v381, 0
    %v405 = vsel %vm394, %v382, 0
    %407 = vmatprep.subr.bf16.mxu0 %v372
    %408 = vmatpush1.bf16.msra.mxu0 %v371
    %409 = vmatprep.subr.bf16.mxu0 %v376
    %410 = vmatpush1.bf16.msra.mxu0 %v375
    %411 = vmatprep.subr.bf16.mxu0 %v399
    %412 = vmatpush1.bf16.msra.mxu0 %v396
    %413 = vmatprep.subr.bf16.mxu0 0
    %414 = vmatpush1.bf16.msra.mxu0 0
    %415 = vmatprep.subr.bf16.mxu0 0
    %416 = vmatpush1.bf16.msra.mxu0 0
    %417 = vmatprep.subr.bf16.mxu0 0
    %418 = vmatpush1.bf16.msra.mxu0 0
    %419 = vmatprep.subr.bf16.mxu0 0
    %420 = vmatpush1.bf16.msra.mxu0 0
    %421 = vmatprep.subr.bf16.mxu0 0
    %422 = vmatpush1.bf16.msra.mxu0 0
    %423 = vmatprep.subr.bf16.mxu0 0
    %424 = vmatpush1.bf16.msra.mxu0 0
    %425 = vmatprep.subr.bf16.mxu0 0
    %426 = vmatpush1.bf16.msra.mxu0 0
    %427 = vmatprep.subr.bf16.mxu0 0
    %428 = vmatpush1.bf16.msra.mxu0 0
    %429 = vmatprep.subr.bf16.mxu0 0
    %430 = vmatpush1.bf16.msra.mxu0 0
    %431 = vmatprep.subr.bf16.mxu0 0
    %432 = vmatpush1.bf16.msra.mxu0 0
    %433 = vmatprep.subr.bf16.mxu0 0
    %434 = vmatpush1.bf16.msra.mxu0 0
    %435 = vmatprep.subr.bf16.mxu0 0
    %436 = vmatpush1.bf16.msra.mxu0 0
    %437 = vmatprep.subr.bf16.mxu0 0
    %438 = vmatpush1.bf16.msra.mxu0 0
    %439 = vmatprep.mubr.bf16.mxu0 0
    %440 = vmatmul.mubr.bf16.gmra.mrb[0].mxu0 %v392
    %v441 = vpop.f32.mrb[0].mxu0
    %v442 = vadd.f32 %v388, %v441
    %v443 = vpop.f32.mrb[0].mxu0
    %v444 = vadd.f32 %v388, %v443
    %v445 = vpop.f32.mrb[0].mxu0
    %v446 = vpop.f32.mrb[0].mxu0
    %447 = vdwg.mxu0
    %448 = vmatprep.subr.bf16.mxu0 %v374
    %449 = vmatpush1.bf16.msra.mxu0 %v373
    %450 = vmatprep.subr.bf16.mxu0 %v378
    %451 = vmatpush1.bf16.msra.mxu0 %v377
    %452 = vmatprep.subr.bf16.mxu0 %v405
    %453 = vmatpush1.bf16.msra.mxu0 %v402
    %454 = vmatprep.subr.bf16.mxu0 0
    %455 = vmatpush1.bf16.msra.mxu0 0
    %456 = vmatprep.subr.bf16.mxu0 0
    %457 = vmatpush1.bf16.msra.mxu0 0
    %458 = vmatprep.subr.bf16.mxu0 0
    %459 = vmatpush1.bf16.msra.mxu0 0
    %460 = vmatprep.subr.bf16.mxu0 0
    %461 = vmatpush1.bf16.msra.mxu0 0
    %462 = vmatprep.subr.bf16.mxu0 0
    %463 = vmatpush1.bf16.msra.mxu0 0
    %464 = vmatprep.subr.bf16.mxu0 0
    %465 = vmatpush1.bf16.msra.mxu0 0
    %466 = vmatprep.subr.bf16.mxu0 0
    %467 = vmatpush1.bf16.msra.mxu0 0
    %468 = vmatprep.subr.bf16.mxu0 0
    %469 = vmatpush1.bf16.msra.mxu0 0
    %470 = vmatprep.subr.bf16.mxu0 0
    %471 = vmatpush1.bf16.msra.mxu0 0
    %472 = vmatprep.subr.bf16.mxu0 0
    %473 = vmatpush1.bf16.msra.mxu0 0
    %474 = vmatprep.subr.bf16.mxu0 0
    %475 = vmatpush1.bf16.msra.mxu0 0
    %476 = vmatprep.subr.bf16.mxu0 0
    %477 = vmatpush1.bf16.msra.mxu0 0
    %478 = vmatprep.subr.bf16.mxu0 0
    %479 = vmatpush1.bf16.msra.mxu0 0
    %480 = vmatprep.mubr.bf16.mxu0 0
    %481 = vmatmul.mubr.bf16.gmra.mrb[0].mxu0 %v392
    %v482 = vpop.f32.mrb[0].mxu0
    %v483 = vadd.f32 %v388, %v482
    %v484 = vpop.f32.mrb[0].mxu0
    %v485 = vadd.f32 %v388, %v484
    %v486 = vpop.f32.mrb[0].mxu0
    %v487 = vpop.f32.mrb[0].mxu0
    %488 = vdwg.mxu0
    %v489 = vmax.f32 %v442, 0.0
    %v490 = vmax.f32 %v444, 0.0
    %v491 = vmax.f32 %v483, 0.0
    %v492 = vmax.f32 %v485, 0.0
    %493 = vrot.lane.b32.xlu0 %v489, 17
    %v494 = vpop.permute.xlu0 %493
    %495 = vrot.lane.b32.xlu0 %v490, 17
    %v496 = vpop.permute.xlu0 %495
    %497 = vrot.lane.b32.xlu0 %v491, 17
    %v498 = vpop.permute.xlu0 %497
    %499 = vrot.lane.b32.xlu0 %v492, 17
    %v500 = vpop.permute.xlu0 %499
    %v501 = vsel %vm82, %v498, %v500
    %v502 = vsel %vm82, %v496, %v498
    %v503 = vsel %vm82, %v494, %v496
    %v504 = vsel %vm82, %v500, %v494
    %v505 = vmul.f32 %v504, %v103
    %v506 = vmul.f32 %v503, %v104
    %v507 = vmul.f32 %v502, %v105
    %v508 = vmul.f32 %v501, %v106
    %509 = vrot.lane.b32.xlu0 %v489, 16
    %v510 = vpop.permute.xlu0 %509
    %511 = vrot.lane.b32.xlu0 %v490, 16
    %v512 = vpop.permute.xlu0 %511
    %513 = vrot.lane.b32.xlu0 %v491, 16
    %v514 = vpop.permute.xlu0 %513
    %515 = vrot.lane.b32.xlu0 %v492, 16
    %v516 = vpop.permute.xlu0 %515
    %v517 = vsel %vm119, %v514, %v516
    %v518 = vsel %vm119, %v512, %v514
    %v519 = vsel %vm119, %v510, %v512
    %v520 = vsel %vm119, %v516, %v510
    %v521 = vmul.f32 %v520, %v128
    %v522 = vmul.f32 %v519, %v129
    %v523 = vmul.f32 %v518, %v130
    %v524 = vmul.f32 %v517, %v131
    %525 = vrot.lane.b32.xlu0 %v489, 15
    %v526 = vpop.permute.xlu0 %525
    %527 = vrot.lane.b32.xlu0 %v490, 15
    %v528 = vpop.permute.xlu0 %527
    %529 = vrot.lane.b32.xlu0 %v491, 15
    %v530 = vpop.permute.xlu0 %529
    %531 = vrot.lane.b32.xlu0 %v492, 15
    %v532 = vpop.permute.xlu0 %531
    %v533 = vsel %vm144, %v530, %v532
    %v534 = vsel %vm144, %v528, %v530
    %v535 = vsel %vm144, %v526, %v528
    %v536 = vsel %vm144, %v532, %v526
    %v537 = vmul.f32 %v536, %v161
    %v538 = vmul.f32 %v535, %v162
    %v539 = vmul.f32 %v534, %v163
    %v540 = vmul.f32 %v533, %v164
    %541 = vrot.lane.b32.xlu0 %v489, 1
    %v542 = vpop.permute.xlu0 %541
    %543 = vrot.lane.b32.xlu0 %v490, 1
    %v544 = vpop.permute.xlu0 %543
    %545 = vrot.lane.b32.xlu0 %v491, 1
    %v546 = vpop.permute.xlu0 %545
    %547 = vrot.lane.b32.xlu0 %v492, 1
    %v548 = vpop.permute.xlu0 %547
    %v549 = vsel %vm177, %v546, %v548
    %v550 = vsel %vm177, %v544, %v546
    %v551 = vsel %vm177, %v542, %v544
    %v552 = vsel %vm177, %v548, %v542
    %v553 = vmul.f32 %v552, %v186
    %v554 = vmul.f32 %v551, %v187
    %v555 = vmul.f32 %v550, %v188
    %v556 = vmul.f32 %v549, %v189
    %557 = vrot.lane.b32.xlu0 %v489, 127
    %v558 = vpop.permute.xlu0 %557
    %559 = vrot.lane.b32.xlu0 %v490, 127
    %v560 = vpop.permute.xlu0 %559
    %561 = vrot.lane.b32.xlu0 %v491, 127
    %v562 = vpop.permute.xlu0 %561
    %563 = vrot.lane.b32.xlu0 %v492, 127
    %v564 = vpop.permute.xlu0 %563
    %v565 = vsel %vm202, %v562, %v564
    %v566 = vsel %vm202, %v560, %v562
    %v567 = vsel %vm202, %v558, %v560
    %v568 = vsel %vm202, %v564, %v558
    %v569 = vmul.f32 %v567, %v211
    %v570 = vmul.f32 %v566, %v212
    %v571 = vmul.f32 %v565, %v213
    %v572 = vmul.f32 %v568, %v214
    %573 = vrot.lane.b32.xlu0 %v489, 113
    %v574 = vpop.permute.xlu0 %573
    %575 = vrot.lane.b32.xlu0 %v490, 113
    %v576 = vpop.permute.xlu0 %575
    %577 = vrot.lane.b32.xlu0 %v491, 113
    %v578 = vpop.permute.xlu0 %577
    %579 = vrot.lane.b32.xlu0 %v492, 113
    %v580 = vpop.permute.xlu0 %579
    %v581 = vsel %vm227, %v578, %v580
    %v582 = vsel %vm227, %v576, %v578
    %v583 = vsel %vm227, %v574, %v576
    %v584 = vsel %vm227, %v580, %v574
    %v585 = vmul.f32 %v583, %v244
    %v586 = vmul.f32 %v582, %v245
    %v587 = vmul.f32 %v581, %v246
    %v588 = vmul.f32 %v584, %v247
    %589 = vrot.lane.b32.xlu0 %v489, 112
    %v590 = vpop.permute.xlu0 %589
    %591 = vrot.lane.b32.xlu0 %v490, 112
    %v592 = vpop.permute.xlu0 %591
    %593 = vrot.lane.b32.xlu0 %v491, 112
    %v594 = vpop.permute.xlu0 %593
    %595 = vrot.lane.b32.xlu0 %v492, 112
    %v596 = vpop.permute.xlu0 %595
    %v597 = vsel %vm260, %v594, %v596
    %v598 = vsel %vm260, %v592, %v594
    %v599 = vsel %vm260, %v590, %v592
    %v600 = vsel %vm260, %v596, %v590
    %v601 = vmul.f32 %v599, %v269
    %v602 = vmul.f32 %v598, %v270
    %v603 = vmul.f32 %v597, %v271
    %v604 = vmul.f32 %v600, %v272
    %605 = vrot.lane.b32.xlu0 %v489, 111
    %v606 = vpop.permute.xlu0 %605
    %607 = vrot.lane.b32.xlu0 %v490, 111
    %v608 = vpop.permute.xlu0 %607
    %609 = vrot.lane.b32.xlu0 %v491, 111
    %v610 = vpop.permute.xlu0 %609
    %611 = vrot.lane.b32.xlu0 %v492, 111
    %v612 = vpop.permute.xlu0 %611
    %v613 = vsel %vm285, %v610, %v612
    %v614 = vsel %vm285, %v608, %v610
    %v615 = vsel %vm285, %v606, %v608
    %v616 = vsel %vm285, %v612, %v606
    %v617 = vmul.f32 %v615, %v298
    %v618 = vmul.f32 %v614, %v299
    %v619 = vmul.f32 %v613, %v300
    %v620 = vmul.f32 %v616, %v301
    %v621 = vpack.c.bf16 %v521, %v505
    %v622 = vpack.c.bf16 %v522, %v506
    %v623 = vpack.c.bf16 %v523, %v507
    %v624 = vpack.c.bf16 %v524, %v508
    %v625 = vpack.c.bf16 %v553, %v537
    %v626 = vpack.c.bf16 %v554, %v538
    %v627 = vpack.c.bf16 %v555, %v539
    %v628 = vpack.c.bf16 %v556, %v540
    %v629 = vpack.c.bf16 %v569, %v489
    %v630 = vpack.c.bf16 %v570, %v490
    %v631 = vpack.c.bf16 %v571, %v491
    %v632 = vpack.c.bf16 %v572, %v492
    %v633 = vpack.c.bf16 %v601, %v585
    %v634 = vpack.c.bf16 %v602, %v586
    %v635 = vpack.c.bf16 %v603, %v587
    %v636 = vpack.c.bf16 %v604, %v588
    %v637 = vpack.c.bf16 %v617, %v617
    %v638 = vpack.c.bf16 %v618, %v618
    %v639 = vpack.c.bf16 %v619, %v619
    %v640 = vpack.c.bf16 %v620, %v620
    %v641 = vld [vmem:[%s3] sm:$0xf]
    %v642 = vld [vmem:[%s4] sm:$0xff]
    %644 = vset.pattern.permute.xlu0 0
    %645 = vperm.xlu0 %644, %v642
    %v646 = vpop.permute.xlu0 %645
    %vm648 = vcmask 588800
    %v650 = vsel %vm648, %v641, 0
    %v653 = vsel %vm354, %v637, 0
    %v656 = vsel %vm354, %v638, 0
    %v659 = vsel %vm354, %v639, 0
    %v662 = vsel %vm354, %v640, 0
    %664 = vmatprep.subr.bf16.mxu0 %v622
    %665 = vmatpush1.bf16.msra.mxu0 %v621
    %666 = vmatprep.subr.bf16.mxu0 %v626
    %667 = vmatpush1.bf16.msra.mxu0 %v625
    %668 = vmatprep.subr.bf16.mxu0 %v630
    %669 = vmatpush1.bf16.msra.mxu0 %v629
    %670 = vmatprep.subr.bf16.mxu0 %v634
    %671 = vmatpush1.bf16.msra.mxu0 %v633
    %672 = vmatprep.subr.bf16.mxu0 %v656
    %673 = vmatpush1.bf16.msra.mxu0 %v653
    %674 = vmatprep.subr.bf16.mxu0 0
    %675 = vmatpush1.bf16.msra.mxu0 0
    %676 = vmatprep.subr.bf16.mxu0 0
    %677 = vmatpush1.bf16.msra.mxu0 0
    %678 = vmatprep.subr.bf16.mxu0 0
    %679 = vmatpush1.bf16.msra.mxu0 0
    %680 = vmatprep.subr.bf16.mxu0 0
    %681 = vmatpush1.bf16.msra.mxu0 0
    %682 = vmatprep.subr.bf16.mxu0 0
    %683 = vmatpush1.bf16.msra.mxu0 0
    %684 = vmatprep.subr.bf16.mxu0 0
    %685 = vmatpush1.bf16.msra.mxu0 0
    %686 = vmatprep.subr.bf16.mxu0 0
    %687 = vmatpush1.bf16.msra.mxu0 0
    %688 = vmatprep.subr.bf16.mxu0 0
    %689 = vmatpush1.bf16.msra.mxu0 0
    %690 = vmatprep.subr.bf16.mxu0 0
    %691 = vmatpush1.bf16.msra.mxu0 0
    %692 = vmatprep.subr.bf16.mxu0 0
    %693 = vmatpush1.bf16.msra.mxu0 0
    %694 = vmatprep.subr.bf16.mxu0 0
    %695 = vmatpush1.bf16.msra.mxu0 0
    %696 = vmatprep.mubr.bf16.mxu0 0
    %697 = vmatmul.mubr.bf16.gmra.mrb[0].mxu0 %v650
    %v698 = vpop.f32.mrb[0].mxu0
    %v699 = vadd.f32 %v646, %v698
    %v700 = vpop.f32.mrb[0].mxu0
    %v701 = vadd.f32 %v646, %v700
    %v702 = vpop.f32.mrb[0].mxu0
    %v703 = vpop.f32.mrb[0].mxu0
    %704 = vdwg.mxu0
    %705 = vmatprep.subr.bf16.mxu0 %v624
    %706 = vmatpush1.bf16.msra.mxu0 %v623
    %707 = vmatprep.subr.bf16.mxu0 %v628
    %708 = vmatpush1.bf16.msra.mxu0 %v627
    %709 = vmatprep.subr.bf16.mxu0 %v632
    %710 = vmatpush1.bf16.msra.mxu0 %v631
    %711 = vmatprep.subr.bf16.mxu0 %v636
    %712 = vmatpush1.bf16.msra.mxu0 %v635
    %713 = vmatprep.subr.bf16.mxu0 %v662
    %714 = vmatpush1.bf16.msra.mxu0 %v659
    %715 = vmatprep.subr.bf16.mxu0 0
    %716 = vmatpush1.bf16.msra.mxu0 0
    %717 = vmatprep.subr.bf16.mxu0 0
    %718 = vmatpush1.bf16.msra.mxu0 0
    %719 = vmatprep.subr.bf16.mxu0 0
    %720 = vmatpush1.bf16.msra.mxu0 0
    %721 = vmatprep.subr.bf16.mxu0 0
    %722 = vmatpush1.bf16.msra.mxu0 0
    %723 = vmatprep.subr.bf16.mxu0 0
    %724 = vmatpush1.bf16.msra.mxu0 0
    %725 = vmatprep.subr.bf16.mxu0 0
    %726 = vmatpush1.bf16.msra.mxu0 0
    %727 = vmatprep.subr.bf16.mxu0 0
    %728 = vmatpush1.bf16.msra.mxu0 0
    %729 = vmatprep.subr.bf16.mxu0 0
    %730 = vmatpush1.bf16.msra.mxu0 0
    %731 = vmatprep.subr.bf16.mxu0 0
    %732 = vmatpush1.bf16.msra.mxu0 0
    %733 = vmatprep.subr.bf16.mxu0 0
    %734 = vmatpush1.bf16.msra.mxu0 0
    %735 = vmatprep.subr.bf16.mxu0 0
    %736 = vmatpush1.bf16.msra.mxu0 0
    %737 = vmatprep.mubr.bf16.mxu0 0
    %738 = vmatmul.mubr.bf16.gmra.mrb[0].mxu0 %v650
    %v739 = vpop.f32.mrb[0].mxu0
    %v740 = vadd.f32 %v646, %v739
    %v741 = vpop.f32.mrb[0].mxu0
    %v742 = vadd.f32 %v646, %v741
    %v743 = vpop.f32.mrb[0].mxu0
    %v744 = vpop.f32.mrb[0].mxu0
    %745 = vdwg.mxu0
    %v746 = vmax.f32 %v699, 0.0
    %v747 = vmax.f32 %v701, 0.0
    %v748 = vmax.f32 %v740, 0.0
    %v749 = vmax.f32 %v742, 0.0
    %750 = vrot.lane.b32.xlu0 %v746, 127
    %v751 = vpop.permute.xlu0 %750
    %752 = vrot.lane.b32.xlu0 %v747, 127
    %v753 = vpop.permute.xlu0 %752
    %754 = vrot.lane.b32.xlu0 %v748, 127
    %v755 = vpop.permute.xlu0 %754
    %756 = vrot.lane.b32.xlu0 %v749, 127
    %v757 = vpop.permute.xlu0 %756
    %v758 = vsel %vm202, %v755, %v757
    %v759 = vsel %vm202, %v753, %v755
    %v760 = vsel %vm202, %v751, %v753
    %v761 = vsel %vm202, %v757, %v751
    %v762 = vmax.f32 %v746, %v760
    %v763 = vmax.f32 %v747, %v759
    %v764 = vmax.f32 %v748, %v758
    %v765 = vmax.f32 %v749, %v761
    %766 = vrot.lane.b32.xlu0 %v746, 112
    %v767 = vpop.permute.xlu0 %766
    %768 = vrot.lane.b32.xlu0 %v747, 112
    %v769 = vpop.permute.xlu0 %768
    %770 = vrot.lane.b32.xlu0 %v748, 112
    %v771 = vpop.permute.xlu0 %770
    %772 = vrot.lane.b32.xlu0 %v749, 112
    %v773 = vpop.permute.xlu0 %772
    %v774 = vsel %vm260, %v771, %v773
    %v775 = vsel %vm260, %v769, %v771
    %v776 = vsel %vm260, %v767, %v769
    %v777 = vsel %vm260, %v773, %v767
    %778 = vrot.lane.b32.xlu0 %v746, 111
    %v779 = vpop.permute.xlu0 %778
    %780 = vrot.lane.b32.xlu0 %v747, 111
    %v781 = vpop.permute.xlu0 %780
    %782 = vrot.lane.b32.xlu0 %v748, 111
    %v783 = vpop.permute.xlu0 %782
    %784 = vrot.lane.b32.xlu0 %v749, 111
    %v785 = vpop.permute.xlu0 %784
    %v786 = vsel %vm285, %v783, %v785
    %v787 = vsel %vm285, %v781, %v783
    %v788 = vsel %vm285, %v779, %v781
    %v789 = vsel %vm285, %v785, %v779
    %v790 = vmax.f32 %v776, %v788
    %v791 = vmax.f32 %v775, %v787
    %v792 = vmax.f32 %v774, %v786
    %v793 = vmax.f32 %v777, %v789
    %v794 = vmax.f32 %v762, %v790
    %v795 = vmax.f32 %v763, %v791
    %v796 = vmax.f32 %v764, %v792
    %v797 = vmax.f32 %v765, %v793
    %v800 = vrot.slane %v794, 1
    %v801 = vrot.slane %v795, 1
    %v804 = vrot.slane %v794, 2
    %v805 = vrot.slane %v795, 2
    %v808 = vrot.slane %v794, 3
    %v809 = vrot.slane %v795, 3
    %v812 = vrot.slane %v794, 4
    %v813 = vrot.slane %v795, 4
    %v816 = vrot.slane %v794, 5
    %v817 = vrot.slane %v795, 5
    %v820 = vrot.slane %v794, 6
    %v821 = vrot.slane %v795, 6
    %v824 = vrot.slane %v794, 7
    %v825 = vrot.slane %v795, 7
    %v830 = vrot.slane %v796, 1
    %v831 = vrot.slane %v797, 1
    %v832 = vrot.slane %v796, 2
    %v833 = vrot.slane %v797, 2
    %v834 = vrot.slane %v796, 3
    %v835 = vrot.slane %v797, 3
    %v836 = vrot.slane %v796, 4
    %v837 = vrot.slane %v797, 4
    %v838 = vrot.slane %v796, 5
    %v839 = vrot.slane %v797, 5
    %v840 = vrot.slane %v796, 6
    %v841 = vrot.slane %v797, 6
    %v842 = vrot.slane %v796, 7
    %v843 = vrot.slane %v797, 7
    %v844 = vrot.slane %v830, 7
    %v845 = vrot.slane %v831, 7
    %v846 = vrot.slane %v832, 7
    %v847 = vrot.slane %v833, 7
    %v848 = vrot.slane %v834, 7
    %v849 = vrot.slane %v835, 7
    %v850 = vrot.slane %v836, 7
    %v851 = vrot.slane %v837, 7
    %v852 = vrot.slane %v838, 7
    %v853 = vrot.slane %v839, 7
    %v854 = vrot.slane %v840, 7
    %v855 = vrot.slane %v841, 7
    %v856 = vrot.slane %v842, 7
    %v857 = vrot.slane %v843, 7
    %vm874 = vcmask 1040384
    %v875 = vsel %vm874, %v794, %v842
    %v876 = vsel %vm874, %v795, %v843
    %v877 = vsel %vm874, %v800, %v844
    %v878 = vsel %vm874, %v801, %v845
    %v879 = vsel %vm874, %v804, %v846
    %v880 = vsel %vm874, %v805, %v847
    %v881 = vsel %vm874, %v808, %v848
    %v882 = vsel %vm874, %v809, %v849
    %v883 = vsel %vm874, %v812, %v850
    %v884 = vsel %vm874, %v813, %v851
    %v885 = vsel %vm874, %v816, %v852
    %v886 = vsel %vm874, %v817, %v853
    %v887 = vsel %vm874, %v820, %v854
    %v888 = vsel %vm874, %v821, %v855
    %v889 = vsel %vm874, %v824, %v856
    %v890 = vsel %vm874, %v825, %v857
    %v891 = vpack.c.bf16 %v875, %v875
    %v892 = vpack.c.bf16 %v876, %v876
    %v893 = vpack.c.bf16 %v877, %v877
    %v894 = vpack.c.bf16 %v878, %v878
    %v895 = vpack.c.bf16 %v879, %v879
    %v896 = vpack.c.bf16 %v880, %v880
    %v897 = vpack.c.bf16 %v881, %v881
    %v898 = vpack.c.bf16 %v882, %v882
    %v899 = vpack.c.bf16 %v883, %v883
    %v900 = vpack.c.bf16 %v884, %v884
    %v901 = vpack.c.bf16 %v885, %v885
    %v902 = vpack.c.bf16 %v886, %v886
    %v903 = vpack.c.bf16 %v887, %v887
    %v904 = vpack.c.bf16 %v888, %v888
    %v905 = vpack.c.bf16 %v889, %v889
    %v906 = vpack.c.bf16 %v890, %v890
    %v907 = vld [vmem:[#allocation2] sm:$0xff]
    %v908 = vld [vmem:[#allocation2 + $0x8] sm:$0xff]
    %v909 = vld [vmem:[#allocation2 + $0x10] sm:$0xff]
    %v910 = vld [vmem:[#allocation2 + $0x18] sm:$0xff]
    %v911 = vld [vmem:[#allocation2 + $0x20] sm:$0xff]
    %v912 = vld [vmem:[#allocation2 + $0x28] sm:$0xff]
    %v913 = vld [vmem:[#allocation2 + $0x30] sm:$0xff]
    %v914 = vld [vmem:[#allocation2 + $0x38] sm:$0xff]
    %v915 = vld [vmem:[#allocation2 + $0x40] sm:$0xff]
    %v916 = vld [vmem:[#allocation2 + $0x48] sm:$0xff]
    %v917 = vld [vmem:[#allocation2 + $0x50] sm:$0xff]
    %v918 = vld [vmem:[#allocation2 + $0x58] sm:$0xff]
    %v919 = vld [vmem:[#allocation2 + $0x60] sm:$0xff]
    %v920 = vld [vmem:[#allocation2 + $0x68] sm:$0xff]
    %v921 = vld [vmem:[#allocation2 + $0x70] sm:$0xff]
    %v922 = vld [vmem:[#allocation2 + $0x78] sm:$0xff]
    %v923 = vld [vmem:[#allocation2 + $0x80] sm:$0xff]
    %v924 = vld [vmem:[#allocation2 + $0x88] sm:$0xff]
    %v925 = vld [vmem:[#allocation2 + $0x90] sm:$0xff]
    %v926 = vld [vmem:[#allocation2 + $0x98] sm:$0xff]
    %v927 = vld [vmem:[#allocation2 + $0xa0] sm:$0xff]
    %v928 = vld [vmem:[#allocation2 + $0xa8] sm:$0xff]
    %v929 = vld [vmem:[#allocation2 + $0xb0] sm:$0xff]
    %v930 = vld [vmem:[#allocation2 + $0xb8] sm:$0xff]
    %v931 = vld [vmem:[#allocation2 + $0xc0] sm:$0xff]
    %v932 = vld [vmem:[#allocation2 + $0xc8] sm:$0xff]
    %v933 = vld [vmem:[#allocation2 + $0xd0] sm:$0xff]
    %v934 = vld [vmem:[#allocation2 + $0xd8] sm:$0xff]
    %v935 = vld [vmem:[#allocation2 + $0xe0] sm:$0xff]
    %v936 = vld [vmem:[#allocation2 + $0xe8] sm:$0xff]
    %v937 = vld [vmem:[#allocation2 + $0xf0] sm:$0xff]
    %v938 = vld [vmem:[#allocation2 + $0xf8] sm:$0xff]
    %v939 = vld [vmem:[%s6] sm:$0x1]
    %v941 = vlaneseq
    %v942 = vshrl.u32 %v941, 7
    %v943 = vsub.s32 0, %v942
    %v944 = vrot.slane %v939, %v943
    %v978 = vunpack.c.l.b16 %v907
    %v979 = vunpack.c.h.b16 %v907
    %v980 = vunpack.c.l.b16 %v908
    %v981 = vunpack.c.h.b16 %v908
    %v982 = vunpack.c.l.b16 %v909
    %v983 = vunpack.c.h.b16 %v909
    %v984 = vunpack.c.l.b16 %v910
    %v985 = vunpack.c.h.b16 %v910
    %v986 = vunpack.c.l.b16 %v911
    %v987 = vunpack.c.h.b16 %v911
    %v988 = vunpack.c.l.b16 %v912
    %v989 = vunpack.c.h.b16 %v912
    %v990 = vunpack.c.l.b16 %v913
    %v991 = vunpack.c.h.b16 %v913
    %v992 = vunpack.c.l.b16 %v914
    %v993 = vunpack.c.h.b16 %v914
    %v994 = vunpack.c.l.b16 %v915
    %v995 = vunpack.c.h.b16 %v915
    %v996 = vunpack.c.l.b16 %v916
    %v997 = vunpack.c.h.b16 %v916
    %v998 = vunpack.c.l.b16 %v917
    %v999 = vunpack.c.h.b16 %v917
    %v1000 = vunpack.c.l.b16 %v918
    %v1001 = vunpack.c.h.b16 %v918
    %v1002 = vunpack.c.l.b16 %v919
    %v1003 = vunpack.c.h.b16 %v919
    %v1004 = vunpack.c.l.b16 %v920
    %v1005 = vunpack.c.h.b16 %v920
    %v1006 = vunpack.c.l.b16 %v921
    %v1007 = vunpack.c.h.b16 %v921
    %v1008 = vunpack.c.l.b16 %v922
    %v1009 = vunpack.c.h.b16 %v922
    %v1010 = vunpack.c.l.b16 %v923
    %v1011 = vunpack.c.h.b16 %v923
    %v1012 = vunpack.c.l.b16 %v924
    %v1013 = vunpack.c.h.b16 %v924
    %v1014 = vunpack.c.l.b16 %v925
    %v1015 = vunpack.c.h.b16 %v925
    %v1016 = vunpack.c.l.b16 %v926
    %v1017 = vunpack.c.h.b16 %v926
    %v1018 = vunpack.c.l.b16 %v927
    %v1019 = vunpack.c.h.b16 %v927
    %v1020 = vunpack.c.l.b16 %v928
    %v1021 = vunpack.c.h.b16 %v928
    %v1022 = vunpack.c.l.b16 %v929
    %v1023 = vunpack.c.h.b16 %v929
    %v1024 = vunpack.c.l.b16 %v930
    %v1025 = vunpack.c.h.b16 %v930
    %v1026 = vunpack.c.l.b16 %v931
    %v1027 = vunpack.c.h.b16 %v931
    %v1028 = vunpack.c.l.b16 %v932
    %v1029 = vunpack.c.h.b16 %v932
    %v1030 = vunpack.c.l.b16 %v933
    %v1031 = vunpack.c.h.b16 %v933
    %v1032 = vunpack.c.l.b16 %v934
    %v1033 = vunpack.c.h.b16 %v934
    %v1034 = vunpack.c.l.b16 %v935
    %v1035 = vunpack.c.h.b16 %v935
    %v1036 = vunpack.c.l.b16 %v936
    %v1037 = vunpack.c.h.b16 %v936
    %v1038 = vunpack.c.l.b16 %v937
    %v1039 = vunpack.c.h.b16 %v937
    %v1040 = vunpack.c.l.b16 %v938
    %v1041 = vunpack.c.h.b16 %v938
    %v1042 = vpack.c.b16 %v994, %v978
    %v1043 = vpack.c.b16 %v995, %v979
    %v1044 = vpack.c.b16 %v996, %v980
    %v1045 = vpack.c.b16 %v997, %v981
    %v1046 = vpack.c.b16 %v998, %v982
    %v1047 = vpack.c.b16 %v999, %v983
    %v1048 = vpack.c.b16 %v1000, %v984
    %v1049 = vpack.c.b16 %v1001, %v985
    %v1050 = vpack.c.b16 %v1002, %v986
    %v1051 = vpack.c.b16 %v1003, %v987
    %v1052 = vpack.c.b16 %v1004, %v988
    %v1053 = vpack.c.b16 %v1005, %v989
    %v1054 = vpack.c.b16 %v1006, %v990
    %v1055 = vpack.c.b16 %v1007, %v991
    %v1056 = vpack.c.b16 %v1008, %v992
    %v1057 = vpack.c.b16 %v1009, %v993
    %v1058 = vpack.c.b16 %v1026, %v1010
    %v1059 = vpack.c.b16 %v1027, %v1011
    %v1060 = vpack.c.b16 %v1028, %v1012
    %v1061 = vpack.c.b16 %v1029, %v1013
    %v1062 = vpack.c.b16 %v1030, %v1014
    %v1063 = vpack.c.b16 %v1031, %v1015
    %v1064 = vpack.c.b16 %v1032, %v1016
    %v1065 = vpack.c.b16 %v1033, %v1017
    %v1066 = vpack.c.b16 %v1034, %v1018
    %v1067 = vpack.c.b16 %v1035, %v1019
    %v1068 = vpack.c.b16 %v1036, %v1020
    %v1069 = vpack.c.b16 %v1037, %v1021
    %v1070 = vpack.c.b16 %v1038, %v1022
    %v1071 = vpack.c.b16 %v1039, %v1023
    %v1072 = vpack.c.b16 %v1040, %v1024
    %v1073 = vpack.c.b16 %v1041, %v1025
    %1106 = vmatprep.subr.bf16.mxu0 %v1043
    %1107 = vmatpush1.bf16.xpose.msra.mxu0 %v1042
    %1108 = vmatprep.subr.bf16.mxu0 %v1059
    %1109 = vmatpush1.bf16.xpose.msra.mxu0 %v1058
    %1110 = vmatprep.subr.bf16.mxu0 0
    %1111 = vmatpush1.bf16.xpose.msra.mxu0 0
    %1112 = vmatprep.subr.bf16.mxu0 0
    %1113 = vmatpush1.bf16.xpose.msra.mxu0 0
    %1114 = vmatprep.subr.bf16.mxu0 0
    %1115 = vmatpush1.bf16.xpose.msra.mxu0 0
    %1116 = vmatprep.subr.bf16.mxu0 0
    %1117 = vmatpush1.bf16.xpose.msra.mxu0 0
    %1118 = vmatprep.subr.bf16.mxu0 0
    %1119 = vmatpush1.bf16.xpose.msra.mxu0 0
    %1120 = vmatprep.subr.bf16.mxu0 0
    %1121 = vmatpush1.bf16.xpose.msra.mxu0 0
    %1122 = vmatprep.subr.bf16.mxu0 0
    %1123 = vmatpush1.bf16.xpose.msra.mxu0 0
    %1124 = vmatprep.subr.bf16.mxu0 0
    %1125 = vmatpush1.bf16.xpose.msra.mxu0 0
    %1126 = vmatprep.subr.bf16.mxu0 0
    %1127 = vmatpush1.bf16.xpose.msra.mxu0 0
    %1128 = vmatprep.subr.bf16.mxu0 0
    %1129 = vmatpush1.bf16.xpose.msra.mxu0 0
    %1130 = vmatprep.subr.bf16.mxu0 0
    %1131 = vmatpush1.bf16.xpose.msra.mxu0 0
    %1132 = vmatprep.subr.bf16.mxu0 0
    %1133 = vmatpush1.bf16.xpose.msra.mxu0 0
    %1134 = vmatprep.subr.bf16.mxu0 0
    %1135 = vmatpush1.bf16.xpose.msra.mxu0 0
    %1136 = vmatprep.subr.bf16.mxu0 0
    %1137 = vmatpush1.bf16.xpose.msra.mxu0 0
    %1138 = vmatprep.mubr.bf16.mxu0 %v892
    %1139 = vmatmul.mubr.bf16.gmra.mrb[0].mxu0 %v891
    %v1140 = vpop.f32.mrb[0].mxu0
    %v1141 = vadd.f32 %v944, %v1140
    %v1142 = vpop.f32.mrb[0].mxu0
    %v1143 = vpop.f32.mrb[0].mxu0
    %v1144 = vpop.f32.mrb[0].mxu0
    %1145 = vdwg.mxu0
    %1146 = vmatprep.subr.bf16.mxu0 %v1045
    %1147 = vmatpush1.bf16.xpose.msra.mxu0 %v1044
    %1148 = vmatprep.subr.bf16.mxu0 %v1061
    %1149 = vmatpush1.bf16.xpose.msra.mxu0 %v1060
    %1150 = vmatprep.subr.bf16.mxu0 0
    %1151 = vmatpush1.bf16.xpose.msra.mxu0 0
    %1152 = vmatprep.subr.bf16.mxu0 0
    %1153 = vmatpush1.bf16.xpose.msra.mxu0 0
    %1154 = vmatprep.subr.bf16.mxu0 0
    %1155 = vmatpush1.bf16.xpose.msra.mxu0 0
    %1156 = vmatprep.subr.bf16.mxu0 0
    %1157 = vmatpush1.bf16.xpose.msra.mxu0 0
    %1158 = vmatprep.subr.bf16.mxu0 0
    %1159 = vmatpush1.bf16.xpose.msra.mxu0 0
    %1160 = vmatprep.subr.bf16.mxu0 0
    %1161 = vmatpush1.bf16.xpose.msra.mxu0 0
    %1162 = vmatprep.subr.bf16.mxu0 0
    %1163 = vmatpush1.bf16.xpose.msra.mxu0 0
    %1164 = vmatprep.subr.bf16.mxu0 0
    %1165 = vmatpush1.bf16.xpose.msra.mxu0 0
    %1166 = vmatprep.subr.bf16.mxu0 0
    %1167 = vmatpush1.bf16.xpose.msra.mxu0 0
    %1168 = vmatprep.subr.bf16.mxu0 0
    %1169 = vmatpush1.bf16.xpose.msra.mxu0 0
    %1170 = vmatprep.subr.bf16.mxu0 0
    %1171 = vmatpush1.bf16.xpose.msra.mxu0 0
    %1172 = vmatprep.subr.bf16.mxu0 0
    %1173 = vmatpush1.bf16.xpose.msra.mxu0 0
    %1174 = vmatprep.subr.bf16.mxu0 0
    %1175 = vmatpush1.bf16.xpose.msra.mxu0 0
    %1176 = vmatprep.subr.bf16.mxu0 0
    %1177 = vmatpush1.bf16.xpose.msra.mxu0 0
    %1178 = vmatprep.mubr.bf16.mxu0 %v894
    %1179 = vmatmul.mubr.bf16.gmra.mrb[0].mxu0 %v893
    %v1180 = vpop.f32.mrb[0].mxu0
    %v1181 = vadd.f32 %v1141, %v1180
    %v1182 = vpop.f32.mrb[0].mxu0
    %v1183 = vpop.f32.mrb[0].mxu0
    %v1184 = vpop.f32.mrb[0].mxu0
    %1185 = vdwg.mxu0
    %1186 = vmatprep.subr.bf16.mxu0 %v1047
    %1187 = vmatpush1.bf16.xpose.msra.mxu0 %v1046
    %1188 = vmatprep.subr.bf16.mxu0 %v1063
    %1189 = vmatpush1.bf16.xpose.msra.mxu0 %v1062
    %1190 = vmatprep.subr.bf16.mxu0 0
    %1191 = vmatpush1.bf16.xpose.msra.mxu0 0
    %1192 = vmatprep.subr.bf16.mxu0 0
    %1193 = vmatpush1.bf16.xpose.msra.mxu0 0
    %1194 = vmatprep.subr.bf16.mxu0 0
    %1195 = vmatpush1.bf16.xpose.msra.mxu0 0
    %1196 = vmatprep.subr.bf16.mxu0 0
    %1197 = vmatpush1.bf16.xpose.msra.mxu0 0
    %1198 = vmatprep.subr.bf16.mxu0 0
    %1199 = vmatpush1.bf16.xpose.msra.mxu0 0
    %1200 = vmatprep.subr.bf16.mxu0 0
    %1201 = vmatpush1.bf16.xpose.msra.mxu0 0
    %1202 = vmatprep.subr.bf16.mxu0 0
    %1203 = vmatpush1.bf16.xpose.msra.mxu0 0
    %1204 = vmatprep.subr.bf16.mxu0 0
    %1205 = vmatpush1.bf16.xpose.msra.mxu0 0
    %1206 = vmatprep.subr.bf16.mxu0 0
    %1207 = vmatpush1.bf16.xpose.msra.mxu0 0
    %1208 = vmatprep.subr.bf16.mxu0 0
    %1209 = vmatpush1.bf16.xpose.msra.mxu0 0
    %1210 = vmatprep.subr.bf16.mxu0 0
    %1211 = vmatpush1.bf16.xpose.msra.mxu0 0
    %1212 = vmatprep.subr.bf16.mxu0 0
    %1213 = vmatpush1.bf16.xpose.msra.mxu0 0
    %1214 = vmatprep.subr.bf16.mxu0 0
    %1215 = vmatpush1.bf16.xpose.msra.mxu0 0
    %1216 = vmatprep.subr.bf16.mxu0 0
    %1217 = vmatpush1.bf16.xpose.msra.mxu0 0
    %1218 = vmatprep.mubr.bf16.mxu0 %v896
    %1219 = vmatmul.mubr.bf16.gmra.mrb[0].mxu0 %v895
    %v1220 = vpop.f32.mrb[0].mxu0
    %v1221 = vadd.f32 %v1181, %v1220
    %v1222 = vpop.f32.mrb[0].mxu0
    %v1223 = vpop.f32.mrb[0].mxu0
    %v1224 = vpop.f32.mrb[0].mxu0
    %1225 = vdwg.mxu0
    %1226 = vmatprep.subr.bf16.mxu0 %v1049
    %1227 = vmatpush1.bf16.xpose.msra.mxu0 %v1048
    %1228 = vmatprep.subr.bf16.mxu0 %v1065
    %1229 = vmatpush1.bf16.xpose.msra.mxu0 %v1064
    %1230 = vmatprep.subr.bf16.mxu0 0
    %1231 = vmatpush1.bf16.xpose.msra.mxu0 0
    %1232 = vmatprep.subr.bf16.mxu0 0
    %1233 = vmatpush1.bf16.xpose.msra.mxu0 0
    %1234 = vmatprep.subr.bf16.mxu0 0
    %1235 = vmatpush1.bf16.xpose.msra.mxu0 0
    %1236 = vmatprep.subr.bf16.mxu0 0
    %1237 = vmatpush1.bf16.xpose.msra.mxu0 0
    %1238 = vmatprep.subr.bf16.mxu0 0
    %1239 = vmatpush1.bf16.xpose.msra.mxu0 0
    %1240 = vmatprep.subr.bf16.mxu0 0
    %1241 = vmatpush1.bf16.xpose.msra.mxu0 0
    %1242 = vmatprep.subr.bf16.mxu0 0
    %1243 = vmatpush1.bf16.xpose.msra.mxu0 0
    %1244 = vmatprep.subr.bf16.mxu0 0
    %1245 = vmatpush1.bf16.xpose.msra.mxu0 0
    %1246 = vmatprep.subr.bf16.mxu0 0
    %1247 = vmatpush1.bf16.xpose.msra.mxu0 0
    %1248 = vmatprep.subr.bf16.mxu0 0
    %1249 = vmatpush1.bf16.xpose.msra.mxu0 0
    %1250 = vmatprep.subr.bf16.mxu0 0
    %1251 = vmatpush1.bf16.xpose.msra.mxu0 0
    %1252 = vmatprep.subr.bf16.mxu0 0
    %1253 = vmatpush1.bf16.xpose.msra.mxu0 0
    %1254 = vmatprep.subr.bf16.mxu0 0
    %1255 = vmatpush1.bf16.xpose.msra.mxu0 0
    %1256 = vmatprep.subr.bf16.mxu0 0
    %1257 = vmatpush1.bf16.xpose.msra.mxu0 0
    %1258 = vmatprep.mubr.bf16.mxu0 %v898
    %1259 = vmatmul.mubr.bf16.gmra.mrb[0].mxu0 %v897
    %v1260 = vpop.f32.mrb[0].mxu0
    %v1261 = vadd.f32 %v1221, %v1260
    %v1262 = vpop.f32.mrb[0].mxu0
    %v1263 = vpop.f32.mrb[0].mxu0
    %v1264 = vpop.f32.mrb[0].mxu0
    %1265 = vdwg.mxu0
    %1266 = vmatprep.subr.bf16.mxu0 %v1051
    %1267 = vmatpush1.bf16.xpose.msra.mxu0 %v1050
    %1268 = vmatprep.subr.bf16.mxu0 %v1067
    %1269 = vmatpush1.bf16.xpose.msra.mxu0 %v1066
    %1270 = vmatprep.subr.bf16.mxu0 0
    %1271 = vmatpush1.bf16.xpose.msra.mxu0 0
    %1272 = vmatprep.subr.bf16.mxu0 0
    %1273 = vmatpush1.bf16.xpose.msra.mxu0 0
    %1274 = vmatprep.subr.bf16.mxu0 0
    %1275 = vmatpush1.bf16.xpose.msra.mxu0 0
    %1276 = vmatprep.subr.bf16.mxu0 0
    %1277 = vmatpush1.bf16.xpose.msra.mxu0 0
    %1278 = vmatprep.subr.bf16.mxu0 0
    %1279 = vmatpush1.bf16.xpose.msra.mxu0 0
    %1280 = vmatprep.subr.bf16.mxu0 0
    %1281 = vmatpush1.bf16.xpose.msra.mxu0 0
    %1282 = vmatprep.subr.bf16.mxu0 0
    %1283 = vmatpush1.bf16.xpose.msra.mxu0 0
    %1284 = vmatprep.subr.bf16.mxu0 0
    %1285 = vmatpush1.bf16.xpose.msra.mxu0 0
    %1286 = vmatprep.subr.bf16.mxu0 0
    %1287 = vmatpush1.bf16.xpose.msra.mxu0 0
    %1288 = vmatprep.subr.bf16.mxu0 0
    %1289 = vmatpush1.bf16.xpose.msra.mxu0 0
    %1290 = vmatprep.subr.bf16.mxu0 0
    %1291 = vmatpush1.bf16.xpose.msra.mxu0 0
    %1292 = vmatprep.subr.bf16.mxu0 0
    %1293 = vmatpush1.bf16.xpose.msra.mxu0 0
    %1294 = vmatprep.subr.bf16.mxu0 0
    %1295 = vmatpush1.bf16.xpose.msra.mxu0 0
    %1296 = vmatprep.subr.bf16.mxu0 0
    %1297 = vmatpush1.bf16.xpose.msra.mxu0 0
    %1298 = vmatprep.mubr.bf16.mxu0 %v900
    %1299 = vmatmul.mubr.bf16.gmra.mrb[0].mxu0 %v899
    %v1300 = vpop.f32.mrb[0].mxu0
    %v1301 = vadd.f32 %v1261, %v1300
    %v1302 = vpop.f32.mrb[0].mxu0
    %v1303 = vpop.f32.mrb[0].mxu0
    %v1304 = vpop.f32.mrb[0].mxu0
    %1305 = vdwg.mxu0
    %1306 = vmatprep.subr.bf16.mxu0 %v1053
    %1307 = vmatpush1.bf16.xpose.msra.mxu0 %v1052
    %1308 = vmatprep.subr.bf16.mxu0 %v1069
    %1309 = vmatpush1.bf16.xpose.msra.mxu0 %v1068
    %1310 = vmatprep.subr.bf16.mxu0 0
    %1311 = vmatpush1.bf16.xpose.msra.mxu0 0
    %1312 = vmatprep.subr.bf16.mxu0 0
    %1313 = vmatpush1.bf16.xpose.msra.mxu0 0
    %1314 = vmatprep.subr.bf16.mxu0 0
    %1315 = vmatpush1.bf16.xpose.msra.mxu0 0
    %1316 = vmatprep.subr.bf16.mxu0 0
    %1317 = vmatpush1.bf16.xpose.msra.mxu0 0
    %1318 = vmatprep.subr.bf16.mxu0 0
    %1319 = vmatpush1.bf16.xpose.msra.mxu0 0
    %1320 = vmatprep.subr.bf16.mxu0 0
    %1321 = vmatpush1.bf16.xpose.msra.mxu0 0
    %1322 = vmatprep.subr.bf16.mxu0 0
    %1323 = vmatpush1.bf16.xpose.msra.mxu0 0
    %1324 = vmatprep.subr.bf16.mxu0 0
    %1325 = vmatpush1.bf16.xpose.msra.mxu0 0
    %1326 = vmatprep.subr.bf16.mxu0 0
    %1327 = vmatpush1.bf16.xpose.msra.mxu0 0
    %1328 = vmatprep.subr.bf16.mxu0 0
    %1329 = vmatpush1.bf16.xpose.msra.mxu0 0
    %1330 = vmatprep.subr.bf16.mxu0 0
    %1331 = vmatpush1.bf16.xpose.msra.mxu0 0
    %1332 = vmatprep.subr.bf16.mxu0 0
    %1333 = vmatpush1.bf16.xpose.msra.mxu0 0
    %1334 = vmatprep.subr.bf16.mxu0 0
    %1335 = vmatpush1.bf16.xpose.msra.mxu0 0
    %1336 = vmatprep.subr.bf16.mxu0 0
    %1337 = vmatpush1.bf16.xpose.msra.mxu0 0
    %1338 = vmatprep.mubr.bf16.mxu0 %v902
    %1339 = vmatmul.mubr.bf16.gmra.mrb[0].mxu0 %v901
    %v1340 = vpop.f32.mrb[0].mxu0
    %v1341 = vadd.f32 %v1301, %v1340
    %v1342 = vpop.f32.mrb[0].mxu0
    %v1343 = vpop.f32.mrb[0].mxu0
    %v1344 = vpop.f32.mrb[0].mxu0
    %1345 = vdwg.mxu0
    %1346 = vmatprep.subr.bf16.mxu0 %v1055
    %1347 = vmatpush1.bf16.xpose.msra.mxu0 %v1054
    %1348 = vmatprep.subr.bf16.mxu0 %v1071
    %1349 = vmatpush1.bf16.xpose.msra.mxu0 %v1070
    %1350 = vmatprep.subr.bf16.mxu0 0
    %1351 = vmatpush1.bf16.xpose.msra.mxu0 0
    %1352 = vmatprep.subr.bf16.mxu0 0
    %1353 = vmatpush1.bf16.xpose.msra.mxu0 0
    %1354 = vmatprep.subr.bf16.mxu0 0
    %1355 = vmatpush1.bf16.xpose.msra.mxu0 0
    %1356 = vmatprep.subr.bf16.mxu0 0
    %1357 = vmatpush1.bf16.xpose.msra.mxu0 0
    %1358 = vmatprep.subr.bf16.mxu0 0
    %1359 = vmatpush1.bf16.xpose.msra.mxu0 0
    %1360 = vmatprep.subr.bf16.mxu0 0
    %1361 = vmatpush1.bf16.xpose.msra.mxu0 0
    %1362 = vmatprep.subr.bf16.mxu0 0
    %1363 = vmatpush1.bf16.xpose.msra.mxu0 0
    %1364 = vmatprep.subr.bf16.mxu0 0
    %1365 = vmatpush1.bf16.xpose.msra.mxu0 0
    %1366 = vmatprep.subr.bf16.mxu0 0
    %1367 = vmatpush1.bf16.xpose.msra.mxu0 0
    %1368 = vmatprep.subr.bf16.mxu0 0
    %1369 = vmatpush1.bf16.xpose.msra.mxu0 0
    %1370 = vmatprep.subr.bf16.mxu0 0
    %1371 = vmatpush1.bf16.xpose.msra.mxu0 0
    %1372 = vmatprep.subr.bf16.mxu0 0
    %1373 = vmatpush1.bf16.xpose.msra.mxu0 0
    %1374 = vmatprep.subr.bf16.mxu0 0
    %1375 = vmatpush1.bf16.xpose.msra.mxu0 0
    %1376 = vmatprep.subr.bf16.mxu0 0
    %1377 = vmatpush1.bf16.xpose.msra.mxu0 0
    %1378 = vmatprep.mubr.bf16.mxu0 %v904
    %1379 = vmatmul.mubr.bf16.gmra.mrb[0].mxu0 %v903
    %v1380 = vpop.f32.mrb[0].mxu0
    %v1381 = vadd.f32 %v1341, %v1380
    %v1382 = vpop.f32.mrb[0].mxu0
    %v1383 = vpop.f32.mrb[0].mxu0
    %v1384 = vpop.f32.mrb[0].mxu0
    %1385 = vdwg.mxu0
    %1386 = vmatprep.subr.bf16.mxu0 %v1057
    %1387 = vmatpush1.bf16.xpose.msra.mxu0 %v1056
    %1388 = vmatprep.subr.bf16.mxu0 %v1073
    %1389 = vmatpush1.bf16.xpose.msra.mxu0 %v1072
    %1390 = vmatprep.subr.bf16.mxu0 0
    %1391 = vmatpush1.bf16.xpose.msra.mxu0 0
    %1392 = vmatprep.subr.bf16.mxu0 0
    %1393 = vmatpush1.bf16.xpose.msra.mxu0 0
    %1394 = vmatprep.subr.bf16.mxu0 0
    %1395 = vmatpush1.bf16.xpose.msra.mxu0 0
    %1396 = vmatprep.subr.bf16.mxu0 0
    %1397 = vmatpush1.bf16.xpose.msra.mxu0 0
    %1398 = vmatprep.subr.bf16.mxu0 0
    %1399 = vmatpush1.bf16.xpose.msra.mxu0 0
    %1400 = vmatprep.subr.bf16.mxu0 0
    %1401 = vmatpush1.bf16.xpose.msra.mxu0 0
    %1402 = vmatprep.subr.bf16.mxu0 0
    %1403 = vmatpush1.bf16.xpose.msra.mxu0 0
    %1404 = vmatprep.subr.bf16.mxu0 0
    %1405 = vmatpush1.bf16.xpose.msra.mxu0 0
    %1406 = vmatprep.subr.bf16.mxu0 0
    %1407 = vmatpush1.bf16.xpose.msra.mxu0 0
    %1408 = vmatprep.subr.bf16.mxu0 0
    %1409 = vmatpush1.bf16.xpose.msra.mxu0 0
    %1410 = vmatprep.subr.bf16.mxu0 0
    %1411 = vmatpush1.bf16.xpose.msra.mxu0 0
    %1412 = vmatprep.subr.bf16.mxu0 0
    %1413 = vmatpush1.bf16.xpose.msra.mxu0 0
    %1414 = vmatprep.subr.bf16.mxu0 0
    %1415 = vmatpush1.bf16.xpose.msra.mxu0 0
    %1416 = vmatprep.subr.bf16.mxu0 0
    %1417 = vmatpush1.bf16.xpose.msra.mxu0 0
    %1418 = vmatprep.mubr.bf16.mxu0 %v906
    %1419 = vmatmul.mubr.bf16.gmra.mrb[0].mxu0 %v905
    %v1420 = vpop.f32.mrb[0].mxu0
    %v1421 = vadd.f32 %v1381, %v1420
    %v1422 = vpop.f32.mrb[0].mxu0
    %v1423 = vpop.f32.mrb[0].mxu0
    %v1424 = vpop.f32.mrb[0].mxu0
    %1425 = vdwg.mxu0
    %v1426 = vmax.f32 %v1421, 0.0
    %v1427 = vpack.c.bf16 %v1426, %v1426
    %v1428 = vld [vmem:[%s7] sm:$0xf]
    %v1429 = vld [vmem:[%s7 + $0x4] sm:$0x1]
    %v1430 = vld [vmem:[%s8] sm:$0x1]
    %v1432 = vlaneseq
    %v1433 = vshrl.u32 %v1432, 7
    %v1434 = vsub.s32 0, %v1433
    %v1435 = vrot.slane %v1430, %v1434
    %v1439 = vunpack.c.l.b16 %v1428
    %v1440 = vunpack.c.l.b16 %v1429
    %v1441 = vpack.c.b16 %v1440, %v1439
    %vm1442 = vcmask 261120
    %v1444 = vsel %vm1442, %v1427, 0
    %v1447 = vsel %vm1442, %v1441, 0
    %1449 = vmatprep.subr.bf16.mxu0 0
    %1450 = vmatpush1.bf16.xpose.msra.mxu0 %v1447
    %1451 = vmatprep.subr.bf16.mxu0 0
    %1452 = vmatpush1.bf16.xpose.msra.mxu0 0
    %1453 = vmatprep.subr.bf16.mxu0 0
    %1454 = vmatpush1.bf16.xpose.msra.mxu0 0
    %1455 = vmatprep.subr.bf16.mxu0 0
    %1456 = vmatpush1.bf16.xpose.msra.mxu0 0
    %1457 = vmatprep.subr.bf16.mxu0 0
    %1458 = vmatpush1.bf16.xpose.msra.mxu0 0
    %1459 = vmatprep.subr.bf16.mxu0 0
    %1460 = vmatpush1.bf16.xpose.msra.mxu0 0
    %1461 = vmatprep.subr.bf16.mxu0 0
    %1462 = vmatpush1.bf16.xpose.msra.mxu0 0
    %1463 = vmatprep.subr.bf16.mxu0 0
    %1464 = vmatpush1.bf16.xpose.msra.mxu0 0
    %1465 = vmatprep.subr.bf16.mxu0 0
    %1466 = vmatpush1.bf16.xpose.msra.mxu0 0
    %1467 = vmatprep.subr.bf16.mxu0 0
    %1468 = vmatpush1.bf16.xpose.msra.mxu0 0
    %1469 = vmatprep.subr.bf16.mxu0 0
    %1470 = vmatpush1.bf16.xpose.msra.mxu0 0
    %1471 = vmatprep.subr.bf16.mxu0 0
    %1472 = vmatpush1.bf16.xpose.msra.mxu0 0
    %1473 = vmatprep.subr.bf16.mxu0 0
    %1474 = vmatpush1.bf16.xpose.msra.mxu0 0
    %1475 = vmatprep.subr.bf16.mxu0 0
    %1476 = vmatpush1.bf16.xpose.msra.mxu0 0
    %1477 = vmatprep.subr.bf16.mxu0 0
    %1478 = vmatpush1.bf16.xpose.msra.mxu0 0
    %1479 = vmatprep.subr.bf16.mxu0 0
    %1480 = vmatpush1.bf16.xpose.msra.mxu0 0
    %1481 = vmatprep.mubr.bf16.mxu0 0
    %1482 = vmatmul.mubr.bf16.gmra.mrb[0].mxu0 %v1444
    %v1483 = vpop.f32.mrb[0].mxu0
    %v1484 = vadd.f32 %v1435, %v1483
    %v1485 = vpop.f32.mrb[0].mxu0
    %v1486 = vpop.f32.mrb[0].mxu0
    %v1487 = vpop.f32.mrb[0].mxu0
    %1488 = vdwg.mxu0
    %vm1489 = vcmask 74752
    %1490 = vst.msk [vmem:[#allocation5] sm:$0x3] %vm1489, %v1484
    // Predicated region
    $region42: #{cnn_forward.1} parent=1 // pred_check
      _
    $region43: #{cnn_forward.1} parent=1 // pred_check_branch
      %1492 = sbr.rel (0) target = $region45
    $region44: #{cnn_forward.1} parent=1 // pred_region
      %s1494 = ssub.s32 32, 32
      %1495 = vsyncadd [#allocation4], %s1494
      %s1497 = sshll.u32 [#allocation5], 4
      %s1498 = int_to_ptr.vmem [resolvable:$true] %s1497
      %1500 = dma.vmem_to_hbm [thread:$0]  %s1498, 32, %s9, [#allocation4]
    $region45: #{cnn_forward.1} parent=1 // pred_fallthru
      _
    // Predicated region
    $region46: #{cnn_forward.1} parent=1 // pred_check
      _
    $region47: #{cnn_forward.1} parent=1 // pred_check_branch
      %1502 = sbr.rel (0) target = $region49
    $region48: #{cnn_forward.1} parent=1 // pred_region
      %1503 = dma.done [#allocation4], 32
    $region49: #{cnn_forward.1} parent=1 // pred_fallthru
      _
    %1504 = vsyncpa [#allocation3], 1
    %1505 = vsyncpa [#allocation4], 1

</llo_original>
